<compile_context>
chip_gen: v7x
topology: tpu7x:2x2x1
jax: 0.10.0
libtpu: 0.0.40
codegen_flags: <defaults>
</compile_context>

<pallas_src>
import math

import jax
import jax.numpy as jnp
from jax.experimental import pallas as pl
from jax.experimental.pallas import tpu as pltpu

F32 = jnp.float32
BF16 = jnp.bfloat16


def _round_up(x, m):
    return ((x + m - 1) // m) * m


# ----------------------------------- kernel ----------------------------------- #
def _make_kernel(*, Bt, S, Pq, Vp, D):
    H = S - Pq               # key positions that bypass attention (torch: keys[:, :-P])
    G = Bt * Pq              # batched-matmul batch size for the attention part

    def kernel(q_ref, k_ref, cnt_ref, w_ref, b_ref, o_ref):
        # packed weights (bf16) / biases (f32); wq/bq already scaled by 1/sqrt(D)
        wq, wk, wo, wk_wo = w_ref[0], w_ref[1], w_ref[2], w_ref[3]     # (D, D)
        bq, bk, bo, bh = b_ref[0], b_ref[1], b_ref[2], b_ref[3]        # (1, D)

        # ---- head positions: fused (Wk @ Wo) projection, no attention, no concat ----
        if H > 0:
            k_head = k_ref[:, :H * Vp, :].reshape(Bt * H * Vp, D)      # bf16
            head = jnp.dot(k_head, wk_wo, preferred_element_type=F32) + bh
            o_ref[:, :H * Vp, :] = head.reshape(Bt, H * Vp, D)

        # ---- tail projections: bf16 operands, f32 accumulation ----
        q2 = q_ref[...].reshape(Bt * Pq * Vp, D)                       # bf16
        k_t2 = k_ref[:, H * Vp:, :].reshape(Bt * Pq * Vp, D)           # bf16
        qproj = jnp.dot(q2, wq, preferred_element_type=F32) + bq       # (rows, D) f32, pre-scaled
        kproj = jnp.dot(k_t2, wk, preferred_element_type=F32) + bk     # (rows, D) f32

        # ---- variable-level attention: two batched MXU matmuls ----
        q3 = qproj.reshape(G, Vp, D).astype(BF16)
        k3 = kproj.reshape(G, Vp, D).astype(BF16)
        scores = jnp.einsum("gvd,gjd->gvj", q3, k3,
                            preferred_element_type=F32)                # (G, Vp, Vp), pre-scaled

        # count-weighted softmax over the candidate axis j (duplicate indices preserved)
        s4 = scores.reshape(Bt, Pq, Vp, Vp)
        cnt = cnt_ref[...].reshape(Bt, 1, Vp, Vp)                      # f32 multiplicities
        masked = jnp.where(cnt > 0.0, s4, -1e30)
        m = jnp.max(masked, axis=-1, keepdims=True)
        e = cnt * jnp.exp(masked - m)                                  # 0 where cnt == 0
        w = e * pl.reciprocal(jnp.sum(e, axis=-1, keepdims=True), approx=True)

        w3 = w.reshape(G, Vp, Vp).astype(BF16)
        attn = jnp.einsum("gvj,gjd->gvd", w3, k3,
                          preferred_element_type=F32)                  # (G, Vp, D) f32
        tail = jnp.dot(attn.reshape(Bt * Pq * Vp, D).astype(BF16), wo,
                       preferred_element_type=F32) + bo
        o_ref[:, H * Vp:, :] = tail.reshape(Bt, Pq * Vp, D)

    return kernel


# ---------------------------------- wrapper ------------------------------------ #
def _pick_bt(B, per_batch_bytes, vmem_block_budget=16 * 1024 * 1024):
    """Batch elements per grid step: amortize per-step overhead, fit double-buffered
    blocks in the default scoped VMEM (v7x-safe), keep >= 2 grid steps when B >= 2."""
    cap = max(1, vmem_block_budget // (2 * max(1, per_batch_bytes)))   # x2: double buffering
    if B >= 2:
        cap = min(cap, B // 2)                                         # >= 2 steps for v7x megacore
    cap = min(cap, B)
    bt = 1
    for d in range(1, cap + 1):                                        # largest divisor of B <= cap
        if B % d == 0:
            bt = d
    return bt


def attn_varlevel_forward(queries, keys, var_ccc, params):
    """Pallas TPU forward of Attn_VarLevel (dropout treated as identity / eval mode)."""
    B, Pq, V, D = queries.shape
    Bk, S, R, Dk = keys.shape
    assert (B, V, D) == (Bk, R, Dk) and S >= Pq
    N = var_ccc.shape[-1]
    Vp = _round_up(V, 8)                 # sublane-aligned variable axis
    pad_v = Vp - V
    scale = 1.0 / math.sqrt(D)

    # bf16 activations; V->Vp padding fuses into the cast, rows pre-flattened so every
    # in-kernel reshape is layout-preserving.
    qp = jnp.pad(queries, ((0, 0), (0, 0), (0, pad_v), (0, 0))).astype(BF16)
    qp = qp.reshape(B, Pq * Vp, D)
    kp = jnp.pad(keys, ((0, 0), (0, 0), (0, pad_v), (0, 0))).astype(BF16)
    kp = kp.reshape(B, S * Vp, D)

    # candidate multiplicities C[b, v, j] = #{n : var_ccc[b, v, n] == j}; padded v rows
    # point at variable 0 so every row has a valid candidate (no NaNs); sliced away later.
    idx = jnp.pad(var_ccc.astype(jnp.int32), ((0, 0), (0, pad_v), (0, 0)))   # (B, Vp, N)
    cnt = jax.nn.one_hot(idx, Vp, dtype=F32).sum(axis=2)                     # (B, Vp, Vp)

    # fold 1/sqrt(D) into Wq; fuse the head path Wk->Wo; pack weights/biases
    wq = params["wq"] * scale
    bq = params["bq"] * scale
    wk, bk = params["wk"], params["bk"]
    wo, bo = params["wo"], params["bo"]
    wk_wo = wk @ wo
    b_head = bk @ wo + bo
    w_all = jnp.stack([wq, wk, wo, wk_wo], axis=0).astype(BF16)              # (4, D, D)
    b_all = jnp.stack([bq, bk, bo, b_head], axis=0).astype(F32)[:, None, :]  # (4, 1, D)

    # per-batch block bytes: q + k (bf16) + cnt (f32) + out (f32)
    per_b = (Pq * Vp * D + S * Vp * D) * 2 + Vp * Vp * 4 + S * Vp * D * 4
    Bt = _pick_bt(B, per_b)
    grid = (B // Bt,)

    kernel = _make_kernel(Bt=Bt, S=S, Pq=Pq, Vp=Vp, D=D)

    out = pl.pallas_call(
        kernel,
        out_shape=jax.ShapeDtypeStruct((B, S * Vp, D), F32),
        grid=grid,
        in_specs=[
            pl.BlockSpec((Bt, Pq * Vp, D), lambda i: (i, 0, 0)),
            pl.BlockSpec((Bt, S * Vp, D), lambda i: (i, 0, 0)),
            pl.BlockSpec((Bt, Vp, Vp), lambda i: (i, 0, 0)),
            pl.BlockSpec((4, D, D), lambda i: (0, 0, 0)),
            pl.BlockSpec((4, 1, D), lambda i: (0, 0, 0)),
        ],
        out_specs=pl.BlockSpec((Bt, S * Vp, D), lambda i: (i, 0, 0)),
        compiler_params=pltpu.CompilerParams(
            dimension_semantics=("parallel",)),
    )(qp, kp, cnt, w_all, b_all)

    # TODO(synk): emit an unpadded (B, S, V, D) output via an in-kernel masked V-row store
    # to drop this output-sized slice copy (review item on wrapper HBM traffic).
    return out.reshape(B, S, Vp, D)[:, :, :V, :]


# ----------------------------- pure-JAX reference ------------------------------ #
def attn_varlevel_reference(queries, keys, var_ccc, params):
    B, Pq, V, D = queries.shape
    S = keys.shape[1]
    scale = 1.0 / math.sqrt(D)
    q = queries @ params["wq"] + params["bq"]                 # (B, Pq, V, D)
    k = keys @ params["wk"] + params["bk"]                    # (B, S, V, D)
    k_tail = k[:, S - Pq:]
    onehot = jax.nn.one_hot(var_ccc, V, dtype=F32)            # (B, V, N, V)
    kc = jnp.einsum("bvnj,bpjd->bpvnd", onehot, k_tail)       # gathered keys == values
    scores = jnp.einsum("bpvd,bpvnd->bpvn", q, kc) * scale
    attn = jax.nn.softmax(scores, axis=-1)                    # dropout = identity
    out = jnp.einsum("bpvn,bpvnd->bpvd", attn, kc)
    full = jnp.concatenate([k[:, : S - Pq], out], axis=1)     # (B, S, V, D)
    return full @ params["wo"] + params["bo"]


# -------------------------------- param init ----------------------------------- #
def make_params(key, d_model):
    D = d_model
    ks = jax.random.split(key, 6)
    return {
        "wq": 0.1 * jax.random.normal(ks[0], (D, D), F32),
        "bq": 0.1 * jax.random.normal(ks[1], (D,), F32),
        "wk": 0.1 * jax.random.normal(ks[2], (D, D), F32),
        "bk": 0.1 * jax.random.normal(ks[3], (D,), F32),
        "wo": 0.1 * jax.random.normal(ks[4], (D, D), F32),
        "bo": 0.1 * jax.random.normal(ks[5], (D,), F32),
    }


if __name__ == "__main__":
    B, V, D, N = 2, 4, 32, 2
    S, Pq = 16, 8          # keys have S time positions, queries cover the last Pq

    key = jax.random.PRNGKey(0)
    kq, kk, kc, kp = jax.random.split(key, 4)
    queries = jax.random.normal(kq, (B, Pq, V, D), F32)
    keys = jax.random.normal(kk, (B, S, V, D), F32)
    var_ccc = jax.random.randint(kc, (B, V, N), 0, V, dtype=jnp.int32)
    params = make_params(kp, D)

    out = attn_varlevel_forward(queries, keys, var_ccc, params)
    out = jax.block_until_ready(out)
    assert out.shape == (B, S, V, D), out.shape

    ref = attn_varlevel_reference(queries, keys, var_ccc, params)
    max_err = float(jnp.max(jnp.abs(out - ref)))
    # bf16 matmul operands with f32 accumulation -> comfortably within 1e-2
    assert jnp.allclose(out, ref, atol=1e-2, rtol=1e-2), max_err
    print("KERNEL_OK")
</pallas_src>

<mosaic_0001>
module attributes {stable_mosaic.version = 11 : i64} {
  func.func @kernel(%arg0: i32, %arg1: memref<1x64x32xbf16, #tpu.memory_space<vmem>>, %arg2: memref<1x128x32xbf16, #tpu.memory_space<vmem>>, %arg3: memref<1x8x8xf32, #tpu.memory_space<vmem>>, %arg4: memref<4x32x32xbf16, #tpu.memory_space<vmem>>, %arg5: memref<4x1x32xf32, #tpu.memory_space<vmem>>, %arg6: memref<1x128x32xf32, #tpu.memory_space<vmem>>) attributes {dimension_semantics = [#tpu.dimension_semantics<parallel>], iteration_bounds = array<i64: 2>, scalar_prefetch = 0 : i64, scratch_operands = 0 : i64, tpu.core_type = #tpu.core_type<tc>, window_params = [{transform_indices = @transform_0, window_bounds = array<i64: 1, 64, 32>}, {transform_indices = @transform_1, window_bounds = array<i64: 1, 128, 32>}, {transform_indices = @transform_2, window_bounds = array<i64: 1, 8, 8>}, {pipeline_mode = #tpu.pipeline_mode<synchronous>, transform_indices = @transform_3, window_bounds = array<i64: 4, 32, 32>}, {pipeline_mode = #tpu.pipeline_mode<synchronous>, transform_indices = @transform_4, window_bounds = array<i64: 4, 1, 32>}, {transform_indices = @transform_5, window_bounds = array<i64: 1, 128, 32>}]} {
    %c0 = arith.constant 0 : index
    %c0_0 = arith.constant 0 : index
    %c0_1 = arith.constant 0 : index
    %0 = vector.load %arg4[%c0, %c0_0, %c0_1] : memref<4x32x32xbf16, #tpu.memory_space<vmem>>, vector<1x32x32xbf16>
    %1 = vector.shape_cast %0 : vector<1x32x32xbf16> to vector<32x32xbf16>
    %c1 = arith.constant 1 : index
    %c0_2 = arith.constant 0 : index
    %c0_3 = arith.constant 0 : index
    %2 = vector.load %arg4[%c1, %c0_2, %c0_3] : memref<4x32x32xbf16, #tpu.memory_space<vmem>>, vector<1x32x32xbf16>
    %3 = vector.shape_cast %2 : vector<1x32x32xbf16> to vector<32x32xbf16>
    %c2 = arith.constant 2 : index
    %c0_4 = arith.constant 0 : index
    %c0_5 = arith.constant 0 : index
    %4 = vector.load %arg4[%c2, %c0_4, %c0_5] : memref<4x32x32xbf16, #tpu.memory_space<vmem>>, vector<1x32x32xbf16>
    %5 = vector.shape_cast %4 : vector<1x32x32xbf16> to vector<32x32xbf16>
    %c3 = arith.constant 3 : index
    %c0_6 = arith.constant 0 : index
    %c0_7 = arith.constant 0 : index
    %6 = vector.load %arg4[%c3, %c0_6, %c0_7] : memref<4x32x32xbf16, #tpu.memory_space<vmem>>, vector<1x32x32xbf16>
    %7 = vector.shape_cast %6 : vector<1x32x32xbf16> to vector<32x32xbf16>
    %c0_8 = arith.constant 0 : index
    %c0_9 = arith.constant 0 : index
    %c0_10 = arith.constant 0 : index
    %8 = vector.load %arg5[%c0_8, %c0_9, %c0_10] : memref<4x1x32xf32, #tpu.memory_space<vmem>>, vector<1x1x32xf32>
    %9 = vector.shape_cast %8 : vector<1x1x32xf32> to vector<1x32xf32>
    %c1_11 = arith.constant 1 : index
    %c0_12 = arith.constant 0 : index
    %c0_13 = arith.constant 0 : index
    %10 = vector.load %arg5[%c1_11, %c0_12, %c0_13] : memref<4x1x32xf32, #tpu.memory_space<vmem>>, vector<1x1x32xf32>
    %11 = vector.shape_cast %10 : vector<1x1x32xf32> to vector<1x32xf32>
    %c2_14 = arith.constant 2 : index
    %c0_15 = arith.constant 0 : index
    %c0_16 = arith.constant 0 : index
    %12 = vector.load %arg5[%c2_14, %c0_15, %c0_16] : memref<4x1x32xf32, #tpu.memory_space<vmem>>, vector<1x1x32xf32>
    %13 = vector.shape_cast %12 : vector<1x1x32xf32> to vector<1x32xf32>
    %c3_17 = arith.constant 3 : index
    %c0_18 = arith.constant 0 : index
    %c0_19 = arith.constant 0 : index
    %14 = vector.load %arg5[%c3_17, %c0_18, %c0_19] : memref<4x1x32xf32, #tpu.memory_space<vmem>>, vector<1x1x32xf32>
    %15 = vector.shape_cast %14 : vector<1x1x32xf32> to vector<1x32xf32>
    %c0_20 = arith.constant 0 : index
    %c0_21 = arith.constant 0 : index
    %c0_22 = arith.constant 0 : index
    %16 = vector.load %arg2[%c0_20, %c0_21, %c0_22] : memref<1x128x32xbf16, #tpu.memory_space<vmem>>, vector<1x64x32xbf16>
    %17 = vector.shape_cast %16 : vector<1x64x32xbf16> to vector<64x32xbf16>
    %cst = arith.constant dense<0.000000e+00> : vector<64x32xf32>
    %18 = tpu.matmul %17, %7, %cst {dimension_numbers = #tpu.dot_dimension_numbers<[1], [0], [0], [1], [0, 0, 1, 1], [], []>} : vector<64x32xbf16>, vector<32x32xbf16>, vector<64x32xf32> -> vector<64x32xf32>
    %19 = vector.broadcast %15 : vector<1x32xf32> to vector<64x32xf32>
    %20 = arith.addf %18, %19 : vector<64x32xf32>
    %21 = vector.shape_cast %20 : vector<64x32xf32> to vector<1x64x32xf32>
    %c0_23 = arith.constant 0 : index
    %c0_24 = arith.constant 0 : index
    %c0_25 = arith.constant 0 : index
    %22 = vector.load %arg6[%c0_23, %c0_24, %c0_25] : memref<1x128x32xf32, #tpu.memory_space<vmem>>, vector<1x64x32xf32>
    tpu.vector_store %arg6[%c0_23, %c0_24, %c0_25], %21 {strides = array<i32>} : memref<1x128x32xf32, #tpu.memory_space<vmem>>, vector<1x64x32xf32>,
    %c0_26 = arith.constant 0 : index
    %c0_27 = arith.constant 0 : index
    %c0_28 = arith.constant 0 : index
    %23 = vector.load %arg1[%c0_26, %c0_27, %c0_28] : memref<1x64x32xbf16, #tpu.memory_space<vmem>>, vector<1x64x32xbf16>
    %24 = vector.shape_cast %23 : vector<1x64x32xbf16> to vector<64x32xbf16>
    %c0_29 = arith.constant 0 : index
    %c64 = arith.constant 64 : index
    %c0_30 = arith.constant 0 : index
    %25 = vector.load %arg2[%c0_29, %c64, %c0_30] : memref<1x128x32xbf16, #tpu.memory_space<vmem>>, vector<1x64x32xbf16>
    %26 = vector.shape_cast %25 : vector<1x64x32xbf16> to vector<64x32xbf16>
    %cst_31 = arith.constant dense<0.000000e+00> : vector<64x32xf32>
    %27 = tpu.matmul %24, %1, %cst_31 {dimension_numbers = #tpu.dot_dimension_numbers<[1], [0], [0], [1], [0, 0, 1, 1], [], []>} : vector<64x32xbf16>, vector<32x32xbf16>, vector<64x32xf32> -> vector<64x32xf32>
    %28 = vector.broadcast %9 : vector<1x32xf32> to vector<64x32xf32>
    %29 = arith.addf %27, %28 : vector<64x32xf32>
    %cst_32 = arith.constant dense<0.000000e+00> : vector<64x32xf32>
    %30 = tpu.matmul %26, %3, %cst_32 {dimension_numbers = #tpu.dot_dimension_numbers<[1], [0], [0], [1], [0, 0, 1, 1], [], []>} : vector<64x32xbf16>, vector<32x32xbf16>, vector<64x32xf32> -> vector<64x32xf32>
    %31 = vector.broadcast %11 : vector<1x32xf32> to vector<64x32xf32>
    %32 = arith.addf %30, %31 : vector<64x32xf32>
    %33 = vector.shape_cast %29 : vector<64x32xf32> to vector<8x8x32xf32>
    %34 = arith.truncf %33 : vector<8x8x32xf32> to vector<8x8x32xbf16>
    %35 = vector.shape_cast %32 : vector<64x32xf32> to vector<8x8x32xf32>
    %36 = arith.truncf %35 : vector<8x8x32xf32> to vector<8x8x32xbf16>
    "tpu.trace_start"() <{level = 10 : i32, message = "gvd,gjd->gvj"}> : () -> ()
    %cst_33 = arith.constant dense<0.000000e+00> : vector<8x8x8xf32>
    %37 = tpu.matmul %34, %36, %cst_33 {dimension_numbers = #tpu.dot_dimension_numbers<[2], [2], [1], [1], [0, 0, 0, 1, 1, 1], [0], [0]>} : vector<8x8x32xbf16>, vector<8x8x32xbf16>, vector<8x8x8xf32> -> vector<8x8x8xf32>
    "tpu.trace_stop"() : () -> ()
    %38 = vector.shape_cast %37 : vector<8x8x8xf32> to vector<1x8x8x8xf32>
    %c0_34 = arith.constant 0 : index
    %c0_35 = arith.constant 0 : index
    %c0_36 = arith.constant 0 : index
    %39 = vector.load %arg3[%c0_34, %c0_35, %c0_36] : memref<1x8x8xf32, #tpu.memory_space<vmem>>, vector<1x8x8xf32>
    %40 = vector.shape_cast %39 : vector<1x8x8xf32> to vector<1x1x8x8xf32>
    %cst_37 = arith.constant 0.000000e+00 : f32
    %41 = vector.broadcast %cst_37 : f32 to vector<1x1x8x8xf32>
    %42 = arith.cmpf ogt, %40, %41 : vector<1x1x8x8xf32>
    %cst_38 = arith.constant -1.000000e+30 : f32
    %43 = vector.shape_cast %42 : vector<1x1x8x8xi1> to vector<1x1x8x8xi1>
    %44 = vector.broadcast %43 : vector<1x1x8x8xi1> to vector<1x8x8x8xi1>
    %45 = vector.broadcast %cst_38 : f32 to vector<1x8x8x8xf32>
    %46 = arith.select %44, %38, %45 : vector<1x8x8x8xi1>, vector<1x8x8x8xf32>
    %cst_39 = arith.constant dense<0xFF800000> : vector<1x8x8xf32>
    %47 = vector.multi_reduction <maximumf>, %46, %cst_39 [3] : vector<1x8x8x8xf32> to vector<1x8x8xf32>
    %48 = vector.shape_cast %47 : vector<1x8x8xf32> to vector<1x8x8x1xf32>
    %49 = vector.broadcast %48 : vector<1x8x8x1xf32> to vector<1x8x8x8xf32>
    %50 = arith.subf %46, %49 : vector<1x8x8x8xf32>
    %51 = math.exp %50 : vector<1x8x8x8xf32>
    %52 = vector.broadcast %40 : vector<1x1x8x8xf32> to vector<1x8x8x8xf32>
    %53 = arith.mulf %52, %51 : vector<1x8x8x8xf32>
    %cst_40 = arith.constant dense<0.000000e+00> : vector<1x8x8xf32>
    %54 = vector.multi_reduction <add>, %53, %cst_40 [3] : vector<1x8x8x8xf32> to vector<1x8x8xf32>
    %55 = vector.shape_cast %54 : vector<1x8x8xf32> to vector<1x8x8x1xf32>
    %56 = tpu.reciprocal %55 {approx = true} : vector<1x8x8x1xf32> -> vector<1x8x8x1xf32>
    %57 = vector.broadcast %56 : vector<1x8x8x1xf32> to vector<1x8x8x8xf32>
    %58 = arith.mulf %53, %57 : vector<1x8x8x8xf32>
    %59 = vector.shape_cast %58 : vector<1x8x8x8xf32> to vector<8x8x8xf32>
    %60 = arith.truncf %59 : vector<8x8x8xf32> to vector<8x8x8xbf16>
    "tpu.trace_start"() <{level = 10 : i32, message = "gvj,gjd->gvd"}> : () -> ()
    %cst_41 = arith.constant dense<0.000000e+00> : vector<8x8x32xf32>
    %61 = tpu.matmul %60, %36, %cst_41 {dimension_numbers = #tpu.dot_dimension_numbers<[2], [1], [1], [2], [0, 0, 0, 1, 1, 2], [0], [0]>} : vector<8x8x8xbf16>, vector<8x8x32xbf16>, vector<8x8x32xf32> -> vector<8x8x32xf32>
    "tpu.trace_stop"() : () -> ()
    %62 = vector.shape_cast %61 : vector<8x8x32xf32> to vector<64x32xf32>
    %63 = arith.truncf %62 : vector<64x32xf32> to vector<64x32xbf16>
    %cst_42 = arith.constant dense<0.000000e+00> : vector<64x32xf32>
    %64 = tpu.matmul %63, %5, %cst_42 {dimension_numbers = #tpu.dot_dimension_numbers<[1], [0], [0], [1], [0, 0, 1, 1], [], []>} : vector<64x32xbf16>, vector<32x32xbf16>, vector<64x32xf32> -> vector<64x32xf32>
    %65 = vector.broadcast %13 : vector<1x32xf32> to vector<64x32xf32>
    %66 = arith.addf %64, %65 : vector<64x32xf32>
    %67 = vector.shape_cast %66 : vector<64x32xf32> to vector<1x64x32xf32>
    %c0_43 = arith.constant 0 : index
    %c64_44 = arith.constant 64 : index
    %c0_45 = arith.constant 0 : index
    %68 = vector.load %arg6[%c0_43, %c64_44, %c0_45] : memref<1x128x32xf32, #tpu.memory_space<vmem>>, vector<1x64x32xf32>
    tpu.vector_store %arg6[%c0_43, %c64_44, %c0_45], %67 {strides = array<i32>} : memref<1x128x32xf32, #tpu.memory_space<vmem>>, vector<1x64x32xf32>,
    return
  }
  func.func @transform_0(%arg0: i32) -> (i32, i32, i32) {
    %c0_i32 = arith.constant 0 : i32
    %c0_i32_0 = arith.constant 0 : i32
    %c0_i32_1 = arith.constant 0 : i32
    return %arg0, %c0_i32, %c0_i32_0 : i32, i32, i32
  }
  func.func @transform_1(%arg0: i32) -> (i32, i32, i32) {
    %c0_i32 = arith.constant 0 : i32
    %c0_i32_0 = arith.constant 0 : i32
    %c0_i32_1 = arith.constant 0 : i32
    return %arg0, %c0_i32, %c0_i32_0 : i32, i32, i32
  }
  func.func @transform_2(%arg0: i32) -> (i32, i32, i32) {
    %c0_i32 = arith.constant 0 : i32
    %c0_i32_0 = arith.constant 0 : i32
    %c0_i32_1 = arith.constant 0 : i32
    return %arg0, %c0_i32, %c0_i32_0 : i32, i32, i32
  }
  func.func @transform_3(%arg0: i32) -> (i32, i32, i32) {
    %c0_i32 = arith.constant 0 : i32
    %c0_i32_0 = arith.constant 0 : i32
    %c0_i32_1 = arith.constant 0 : i32
    %c0_i32_2 = arith.constant 0 : i32
    return %c0_i32, %c0_i32_0, %c0_i32_1 : i32, i32, i32
  }
  func.func @transform_4(%arg0: i32) -> (i32, i32, i32) {
    %c0_i32 = arith.constant 0 : i32
    %c0_i32_0 = arith.constant 0 : i32
    %c0_i32_1 = arith.constant 0 : i32
    %c0_i32_2 = arith.constant 0 : i32
    return %c0_i32, %c0_i32_0, %c0_i32_1 : i32, i32, i32
  }
  func.func @transform_5(%arg0: i32) -> (i32, i32, i32) {
    %c0_i32 = arith.constant 0 : i32
    %c0_i32_0 = arith.constant 0 : i32
    %c0_i32_1 = arith.constant 0 : i32
    return %arg0, %c0_i32, %c0_i32_0 : i32, i32, i32
  }
}

</mosaic_0001>

<llo_original>
// kernel: tpu_custom_call.1
$region0: #{tpu_custom_call.1}
  #allocation0 [shape = 'u32[]', space=smem, size = 0x4, offset = 0x4, fixed_abs, tag = 'smem constant byte address 0x4 - core index']
  #allocation1 [shape = 'u32[144,128]{1,0:T(1,128)}', space=vmem, size = 0x12000, scoped, tag = 'internal scratch']
  %s0 = inlined_call_operand.vmem [shape: bf16[2,64,32], index: 0, kind: input, shape index: {}]
  %s1 = inlined_call_operand.vmem [shape: bf16[2,128,32], index: 1, kind: input, shape index: {}]
  %s2 = inlined_call_operand.vmem [shape: f32[2,8,8], index: 2, kind: input, shape index: {}]
  %s3 = inlined_call_operand.vmem [shape: bf16[4,32,32], index: 3, kind: input, shape index: {}]
  %s4 = inlined_call_operand.vmem [shape: f32[4,1,32], index: 4, kind: input, shape index: {}]
  %s5 = inlined_call_operand.vmem [shape: f32[2,128,32], index: 5, kind: output, shape index: {}]
  %s6 = sld [smem:[#allocation0]]
  $region53: #{tpu_custom_call.1} parent=0
    _
  %s8 = ssub.s32 1, %s6
  %s9 = scalar_select 0, %s8, %s6
  loop: start=0, step=1, limit=4
  $region2: #{tpu_custom_call.1} parent=0 // loop_pre_header
    _
  $region3: #{tpu_custom_call.1} parent=0 // loop_header
    %s11 = sphi 0, %s15
    %p12 = scmp.ge.s32.totalorder %s11, 4
    %s21 = sphi 0, %s23
    %s24 = sphi 0, %s21
    %s25 = sphi 0, %s24
    %s41 = sphi 0, %s25
    %s47 = sphi 0, %s49
    %s50 = sphi 0, %s47
    %s51 = sphi 0, %s50
    %s67 = sphi 0, %s51
    %s73 = sphi 0, %s75
    %s76 = sphi 0, %s73
    %s77 = sphi 0, %s76
    %s93 = sphi 0, %s77
    %s97 = sphi 0, %s97
    %s99 = sphi 0, %s97
    %s100 = sphi 0, %s99
    %s114 = sphi 0, %s100
    %s118 = sphi 0, %s118
    %s120 = sphi 0, %s118
    %s121 = sphi 0, %s120
    %s135 = sphi 0, %s121
    %s141 = sphi 0, %s143
    %s144 = sphi 0, %s141
    %s145 = sphi 0, %s144
    %s161 = sphi 0, %s145
  $region4: #{tpu_custom_call.1} parent=0 // loop_header_branch
    %14 = sbr.rel (%p12) target = $region8
  $region5: #{tpu_custom_call.1} parent=0 // loop_body
    %s16 = ssub.s32 %s11, 1
    %s17 = ssub.s32 %s11, 2
    %s18 = sadd.s32 %s11, 1
    %s19 = ssub.s32 %s11, %s18
    %p20 = scmp.eq.s32.totalorder %s19, 0
    %s22 = sadd.s32 %s21, 1
    %s23 = scalar_select %p20, %s21, %s22
    %p26 = pneg %p20
    %p27 = scmp.eq.s32.totalorder %s11, 1
    %p28 = por %p26, %p27
    %p29 = scmp.ne.s32.totalorder %s21, %s24
    %p30 = scmp.eq.s32.totalorder %s11, 0
    %p31 = por %p29, %p30
    %p32 = scmp.ne.s32.totalorder %s21, %s24
    %p33 = scmp.eq.s32.totalorder %s16, 1
    %p34 = por %p32, %p33
    %p35 = scmp.ne.s32.totalorder %s24, %s25
    %p36 = scmp.eq.s32.totalorder %s16, 0
    %p37 = por %p35, %p36
    %p38 = scmp.ne.s32.totalorder %s24, %s25
    %p39 = scmp.eq.s32.totalorder %s17, 1
    %p40 = por %p38, %p39
    %p42 = scmp.ne.s32.totalorder %s25, %s41
    %p43 = scmp.eq.s32.totalorder %s17, 0
    %p44 = por %p42, %p43
    %s45 = ssub.s32 %s11, %s18
    %p46 = scmp.eq.s32.totalorder %s45, 0
    %s48 = sadd.s32 %s47, 1
    %s49 = scalar_select %p46, %s47, %s48
    %p52 = pneg %p46
    %p53 = scmp.eq.s32.totalorder %s11, 1
    %p54 = por %p52, %p53
    %p55 = scmp.ne.s32.totalorder %s47, %s50
    %p56 = scmp.eq.s32.totalorder %s11, 0
    %p57 = por %p55, %p56
    %p58 = scmp.ne.s32.totalorder %s47, %s50
    %p59 = scmp.eq.s32.totalorder %s16, 1
    %p60 = por %p58, %p59
    %p61 = scmp.ne.s32.totalorder %s50, %s51
    %p62 = scmp.eq.s32.totalorder %s16, 0
    %p63 = por %p61, %p62
    %p64 = scmp.ne.s32.totalorder %s50, %s51
    %p65 = scmp.eq.s32.totalorder %s17, 1
    %p66 = por %p64, %p65
    %p68 = scmp.ne.s32.totalorder %s51, %s67
    %p69 = scmp.eq.s32.totalorder %s17, 0
    %p70 = por %p68, %p69
    %s71 = ssub.s32 %s11, %s18
    %p72 = scmp.eq.s32.totalorder %s71, 0
    %s74 = sadd.s32 %s73, 1
    %s75 = scalar_select %p72, %s73, %s74
    %p78 = pneg %p72
    %p79 = scmp.eq.s32.totalorder %s11, 1
    %p80 = por %p78, %p79
    %p81 = scmp.ne.s32.totalorder %s73, %s76
    %p82 = scmp.eq.s32.totalorder %s11, 0
    %p83 = por %p81, %p82
    %p84 = scmp.ne.s32.totalorder %s73, %s76
    %p85 = scmp.eq.s32.totalorder %s16, 1
    %p86 = por %p84, %p85
    %p87 = scmp.ne.s32.totalorder %s76, %s77
    %p88 = scmp.eq.s32.totalorder %s16, 0
    %p89 = por %p87, %p88
    %p90 = scmp.ne.s32.totalorder %s76, %s77
    %p91 = scmp.eq.s32.totalorder %s17, 1
    %p92 = por %p90, %p91
    %p94 = scmp.ne.s32.totalorder %s77, %s93
    %p95 = scmp.eq.s32.totalorder %s17, 0
    %p96 = por %p94, %p95
    %s98 = sadd.s32 %s97, 1
    %p101 = scmp.eq.s32.totalorder %s11, 1
    %p102 = scmp.ne.s32.totalorder %s97, %s99
    %p103 = scmp.eq.s32.totalorder %s11, 0
    %p104 = por %p102, %p103
    %p105 = scmp.ne.s32.totalorder %s97, %s99
    %p106 = scmp.eq.s32.totalorder %s16, 1
    %p107 = por %p105, %p106
    %p108 = scmp.ne.s32.totalorder %s99, %s100
    %p109 = scmp.eq.s32.totalorder %s16, 0
    %p110 = por %p108, %p109
    %p111 = scmp.ne.s32.totalorder %s99, %s100
    %p112 = scmp.eq.s32.totalorder %s17, 1
    %p113 = por %p111, %p112
    %p115 = scmp.ne.s32.totalorder %s100, %s114
    %p116 = scmp.eq.s32.totalorder %s17, 0
    %p117 = por %p115, %p116
    %s119 = sadd.s32 %s118, 1
    %p122 = scmp.eq.s32.totalorder %s11, 1
    %p123 = scmp.ne.s32.totalorder %s118, %s120
    %p124 = scmp.eq.s32.totalorder %s11, 0
    %p125 = por %p123, %p124
    %p126 = scmp.ne.s32.totalorder %s118, %s120
    %p127 = scmp.eq.s32.totalorder %s16, 1
    %p128 = por %p126, %p127
    %p129 = scmp.ne.s32.totalorder %s120, %s121
    %p130 = scmp.eq.s32.totalorder %s16, 0
    %p131 = por %p129, %p130
    %p132 = scmp.ne.s32.totalorder %s120, %s121
    %p133 = scmp.eq.s32.totalorder %s17, 1
    %p134 = por %p132, %p133
    %p136 = scmp.ne.s32.totalorder %s121, %s135
    %p137 = scmp.eq.s32.totalorder %s17, 0
    %p138 = por %p136, %p137
    %s139 = ssub.s32 %s11, %s18
    %p140 = scmp.eq.s32.totalorder %s139, 0
    %s142 = sadd.s32 %s141, 1
    %s143 = scalar_select %p140, %s141, %s142
    %p146 = pneg %p140
    %p147 = scmp.eq.s32.totalorder %s11, 1
    %p148 = por %p146, %p147
    %p149 = scmp.ne.s32.totalorder %s141, %s144
    %p150 = scmp.eq.s32.totalorder %s11, 0
    %p151 = por %p149, %p150
    %p152 = scmp.ne.s32.totalorder %s141, %s144
    %p153 = scmp.eq.s32.totalorder %s16, 1
    %p154 = por %p152, %p153
    %p155 = scmp.ne.s32.totalorder %s144, %s145
    %p156 = scmp.eq.s32.totalorder %s16, 0
    %p157 = por %p155, %p156
    %p158 = scmp.ne.s32.totalorder %s144, %s145
    %p159 = scmp.eq.s32.totalorder %s17, 1
    %p160 = por %p158, %p159
    %p162 = scmp.ne.s32.totalorder %s145, %s161
    %p163 = scmp.eq.s32.totalorder %s17, 0
    %p164 = por %p162, %p163
    %p165 = scmp.le.s32.totalorder 1, %s11
    %p166 = scmp.lt.s32.totalorder %s11, 3
    %p167 = pnand %p165, %p166
    %p168 = pneg %p167
    // Predicated region
    $region9: #{tpu_custom_call.1} parent=5 // pred_check
      _
    $region10: #{tpu_custom_call.1} parent=5 // pred_check_branch
      %170 = sbr.rel (%p167) target = $region12
    $region11: #{tpu_custom_call.1} parent=5 // pred_region
      %s171 = ssub.s32 %s11, 1
      // Predicated region
      $region13: #{tpu_custom_call.1} parent=11 // pred_check
        %p172 = pneg %p110
      $region14: #{tpu_custom_call.1} parent=11 // pred_check_branch
        %174 = sbr.rel (%p172) target = $region16
      $region15: #{tpu_custom_call.1} parent=11 // pred_region
        _
      $region16: #{tpu_custom_call.1} parent=11 // pred_fallthru
        _
      // Predicated region
      $region17: #{tpu_custom_call.1} parent=11 // pred_check
        %p175 = pneg %p131
      $region18: #{tpu_custom_call.1} parent=11 // pred_check_branch
        %177 = sbr.rel (%p175) target = $region20
      $region19: #{tpu_custom_call.1} parent=11 // pred_region
        _
      $region20: #{tpu_custom_call.1} parent=11 // pred_fallthru
        _
    $region12: #{tpu_custom_call.1} parent=5 // pred_fallthru
      _
    %p178 = scmp.lt.s32.totalorder %s11, 2
    // Predicated region
    $region21: #{tpu_custom_call.1} parent=5 // pred_check
      %p179 = pneg %p178
    $region22: #{tpu_custom_call.1} parent=5 // pred_check_branch
      %181 = sbr.rel (%p179) target = $region24
    $region23: #{tpu_custom_call.1} parent=5 // pred_region
      // Predicated region
      $region25: #{tpu_custom_call.1} parent=23 // pred_check
        %p182 = pneg %p31
      $region26: #{tpu_custom_call.1} parent=23 // pred_check_branch
        %184 = sbr.rel (%p182) target = $region28
      $region27: #{tpu_custom_call.1} parent=23 // pred_region
        %p185 = scmp.lt.s32.totalorder %s11, 1
        %s186 = scalar_select %p185, %s11, 1
        %s187 = smul.addr %s186, 8
        %s188 = smul.addr %s187, 4
        %s189 = scalar_lea.vmem %s0, %s188
      $region28: #{tpu_custom_call.1} parent=23 // pred_fallthru
        _
      // Predicated region
      $region29: #{tpu_custom_call.1} parent=23 // pred_check
        %p190 = pneg %p57
      $region30: #{tpu_custom_call.1} parent=23 // pred_check_branch
        %192 = sbr.rel (%p190) target = $region32
      $region31: #{tpu_custom_call.1} parent=23 // pred_region
        %p193 = scmp.lt.s32.totalorder %s11, 1
        %s194 = scalar_select %p193, %s11, 1
        %s195 = smul.addr %s194, 16
        %s196 = smul.addr %s195, 4
        %s197 = scalar_lea.vmem %s1, %s196
      $region32: #{tpu_custom_call.1} parent=23 // pred_fallthru
        _
      // Predicated region
      $region33: #{tpu_custom_call.1} parent=23 // pred_check
        %p198 = pneg %p83
      $region34: #{tpu_custom_call.1} parent=23 // pred_check_branch
        %200 = sbr.rel (%p198) target = $region36
      $region35: #{tpu_custom_call.1} parent=23 // pred_region
        %p201 = scmp.lt.s32.totalorder %s11, 1
        %s202 = scalar_select %p201, %s11, 1
        %s203 = smul.addr %s202, 8
        %s204 = scalar_lea.vmem %s2, %s203
      $region36: #{tpu_custom_call.1} parent=23 // pred_fallthru
        _
    $region24: #{tpu_custom_call.1} parent=5 // pred_fallthru
      _
    %p205 = scmp.le.s32.totalorder 1, %s11
    %p206 = scmp.lt.s32.totalorder %s11, 3
    %p207 = pnand %p205, %p206
    %p208 = pneg %p207
    // Predicated region
    $region37: #{tpu_custom_call.1} parent=5 // pred_check
      _
    $region38: #{tpu_custom_call.1} parent=5 // pred_check_branch
      %210 = sbr.rel (%p207) target = $region40
    $region39: #{tpu_custom_call.1} parent=5 // pred_region
      %s211 = ssub.s32 %s11, 1
      %p212 = scmp.lt.s32.totalorder %s16, 1
      %s213 = scalar_select %p212, %s16, 1
      %s214 = smul.addr %s213, 8
      %s215 = smul.addr %s214, 4
      %s216 = scalar_lea.vmem %s0, %s215
      %p217 = pneg %p37
      %p218 = pneg %p34
      %p219 = scmp.lt.s32.totalorder %s16, 1
      %s220 = scalar_select %p219, %s16, 1
      %s221 = smul.addr %s220, 16
      %s222 = smul.addr %s221, 4
      %s223 = scalar_lea.vmem %s1, %s222
      %p224 = pneg %p63
      %p225 = pneg %p60
      %p226 = scmp.lt.s32.totalorder %s16, 1
      %s227 = scalar_select %p226, %s16, 1
      %s228 = smul.addr %s227, 8
      %s229 = scalar_lea.vmem %s2, %s228
      %p230 = pneg %p89
      %p231 = pneg %p86
      %p232 = pneg %p110
      %p233 = pneg %p107
      %p234 = pneg %p131
      %p235 = pneg %p128
      %p236 = pneg %p157
      %p237 = pneg %p154
      %p238 = scmp.lt.s32.totalorder %s16, 1
      %s239 = scalar_select %p238, %s16, 1
      %s240 = smul.addr %s239, 16
      %s241 = smul.addr %s240, 8
      %s242 = scalar_lea.vmem %s5, %s241
      %p243 = scmp.lt.s32.totalorder %s16, 1
      %s244 = scalar_select %p243, %s16, 1
      %s245 = smul.addr %s244, 8
      %s246 = smul.addr %s245, 4
      %s247 = scalar_lea.vmem %s0, %s246
      %p248 = scmp.lt.s32.totalorder %s16, 1
      %s249 = scalar_select %p248, %s16, 1
      %s250 = smul.addr %s249, 16
      %s251 = smul.addr %s250, 4
      %s252 = scalar_lea.vmem %s1, %s251
      %p253 = scmp.lt.s32.totalorder %s16, 1
      %s254 = scalar_select %p253, %s16, 1
      %s255 = smul.addr %s254, 8
      %s256 = scalar_lea.vmem %s2, %s255
      %p257 = scmp.lt.s32.totalorder %s16, 1
      %s258 = scalar_select %p257, %s16, 1
      %s259 = smul.addr %s258, 16
      %s260 = smul.addr %s259, 8
      %s261 = scalar_lea.vmem %s5, %s260
      %v263 = vld [vmem:[%s3] sm:$0xf]
      %v264 = vld [vmem:[%s3 + $0x4] sm:$0xf]
      %v265 = vld [vmem:[%s3 + $0x8] sm:$0xf]
      %v266 = vld [vmem:[%s3 + $0xc] sm:$0xf]
      %s267 = scalar_lea.vmem %s3, 16
      %v268 = vld [vmem:[%s267] sm:$0xf]
      %v269 = vld [vmem:[%s267 + $0x4] sm:$0xf]
      %v270 = vld [vmem:[%s267 + $0x8] sm:$0xf]
      %v271 = vld [vmem:[%s267 + $0xc] sm:$0xf]
      %s272 = scalar_lea.vmem %s3, 32
      %v273 = vld [vmem:[%s272] sm:$0xf]
      %v274 = vld [vmem:[%s272 + $0x4] sm:$0xf]
      %v275 = vld [vmem:[%s272 + $0x8] sm:$0xf]
      %v276 = vld [vmem:[%s272 + $0xc] sm:$0xf]
      %s277 = scalar_lea.vmem %s3, 48
      %v278 = vld [vmem:[%s277] sm:$0xf]
      %v279 = vld [vmem:[%s277 + $0x4] sm:$0xf]
      %v280 = vld [vmem:[%s277 + $0x8] sm:$0xf]
      %v281 = vld [vmem:[%s277 + $0xc] sm:$0xf]
      %v282 = vld [vmem:[%s4] sm:$0x1]
      %s283 = scalar_lea.vmem %s4, 1
      %v284 = vld [vmem:[%s283] sm:$0x1]
      %s285 = scalar_lea.vmem %s4, 2
      %v286 = vld [vmem:[%s285] sm:$0x1]
      %s287 = scalar_lea.vmem %s4, 3
      %v288 = vld [vmem:[%s287] sm:$0x1]
      %v289 = vld [vmem:[%s252] sm:$0xf]
      %v290 = vld [vmem:[%s252 + $0x4] sm:$0xf]
      %v291 = vld [vmem:[%s252 + $0x8] sm:$0xf]
      %v292 = vld [vmem:[%s252 + $0xc] sm:$0xf]
      %v293 = vld [vmem:[%s252 + $0x10] sm:$0xf]
      %v294 = vld [vmem:[%s252 + $0x14] sm:$0xf]
      %v295 = vld [vmem:[%s252 + $0x18] sm:$0xf]
      %v296 = vld [vmem:[%s252 + $0x1c] sm:$0xf]
      %v298 = vlaneseq
      %v299 = vshrl.u32 %v298, 7
      %v300 = vsub.s32 0, %v299
      %v301 = vrot.slane %v288, %v300
      %v311 = vunpack.c.l.b16 %v289
      %v312 = vunpack.c.l.b16 %v290
      %v313 = vunpack.c.l.b16 %v291
      %v314 = vunpack.c.l.b16 %v292
      %v315 = vunpack.c.l.b16 %v293
      %v316 = vunpack.c.l.b16 %v294
      %v317 = vunpack.c.l.b16 %v295
      %v318 = vunpack.c.l.b16 %v296
      %v319 = vpack.c.b16 %v312, %v311
      %v320 = vpack.c.b16 %v314, %v313
      %v321 = vpack.c.b16 %v316, %v315
      %v322 = vpack.c.b16 %v318, %v317
      %v327 = vunpack.c.l.b16 %v278
      %v328 = vunpack.c.l.b16 %v279
      %v329 = vunpack.c.l.b16 %v280
      %v330 = vunpack.c.l.b16 %v281
      %v331 = vpack.c.b16 %v328, %v327
      %v332 = vpack.c.b16 %v330, %v329
      %vm335 = vcmask 261120
      %v337 = vsel %vm335, %v319, 0
      %v340 = vsel %vm335, %v320, 0
      %v343 = vsel %vm335, %v321, 0
      %v346 = vsel %vm335, %v322, 0
      %348 = vmatprep.subr.bf16.mxu0 0
      %349 = vmatpush1.bf16.msra.mxu0 %v331
      %350 = vmatprep.subr.bf16.mxu0 0
      %351 = vmatpush1.bf16.msra.mxu0 %v332
      %352 = vmatprep.subr.bf16.mxu0 0
      %353 = vmatpush1.bf16.msra.mxu0 0
      %354 = vmatprep.subr.bf16.mxu0 0
      %355 = vmatpush1.bf16.msra.mxu0 0
      %356 = vmatprep.subr.bf16.mxu0 0
      %357 = vmatpush1.bf16.msra.mxu0 0
      %358 = vmatprep.subr.bf16.mxu0 0
      %359 = vmatpush1.bf16.msra.mxu0 0
      %360 = vmatprep.subr.bf16.mxu0 0
      %361 = vmatpush1.bf16.msra.mxu0 0
      %362 = vmatprep.subr.bf16.mxu0 0
      %363 = vmatpush1.bf16.msra.mxu0 0
      %364 = vmatprep.subr.bf16.mxu0 0
      %365 = vmatpush1.bf16.msra.mxu0 0
      %366 = vmatprep.subr.bf16.mxu0 0
      %367 = vmatpush1.bf16.msra.mxu0 0
      %368 = vmatprep.subr.bf16.mxu0 0
      %369 = vmatpush1.bf16.msra.mxu0 0
      %370 = vmatprep.subr.bf16.mxu0 0
      %371 = vmatpush1.bf16.msra.mxu0 0
      %372 = vmatprep.subr.bf16.mxu0 0
      %373 = vmatpush1.bf16.msra.mxu0 0
      %374 = vmatprep.subr.bf16.mxu0 0
      %375 = vmatpush1.bf16.msra.mxu0 0
      %376 = vmatprep.subr.bf16.mxu0 0
      %377 = vmatpush1.bf16.msra.mxu0 0
      %378 = vmatprep.subr.bf16.mxu0 0
      %379 = vmatpush1.bf16.msra.mxu0 0
      %380 = vmatprep.mubr.bf16.mxu0 0
      %381 = vmatmul.mubr.bf16.gmra.mrb[0].mxu0 %v337
      %v382 = vpop.f32.mrb[0].mxu0
      %v383 = vadd.f32 %v301, %v382
      %v384 = vpop.f32.mrb[0].mxu0
      %v385 = vpop.f32.mrb[0].mxu0
      %v386 = vadd.f32 %v301, %v385
      %v387 = vpop.f32.mrb[0].mxu0
      %388 = vmatprep.mubr.bf16.mxu0 0
      %389 = vmatmul.mubr.bf16.gmra.mrb[0].mxu0 %v340
      %v390 = vpop.f32.mrb[0].mxu0
      %v391 = vadd.f32 %v301, %v390
      %v392 = vpop.f32.mrb[0].mxu0
      %v393 = vpop.f32.mrb[0].mxu0
      %v394 = vadd.f32 %v301, %v393
      %v395 = vpop.f32.mrb[0].mxu0
      %396 = vmatprep.mubr.bf16.mxu0 0
      %397 = vmatmul.mubr.bf16.gmra.mrb[0].mxu0 %v343
      %v398 = vpop.f32.mrb[0].mxu0
      %v399 = vadd.f32 %v301, %v398
      %v400 = vpop.f32.mrb[0].mxu0
      %v401 = vpop.f32.mrb[0].mxu0
      %v402 = vadd.f32 %v301, %v401
      %v403 = vpop.f32.mrb[0].mxu0
      %404 = vmatprep.mubr.bf16.mxu0 0
      %405 = vmatmul.mubr.bf16.gmra.mrb[0].mxu0 %v346
      %v406 = vpop.f32.mrb[0].mxu0
      %v407 = vadd.f32 %v301, %v406
      %v408 = vpop.f32.mrb[0].mxu0
      %v409 = vpop.f32.mrb[0].mxu0
      %v410 = vadd.f32 %v301, %v409
      %v411 = vpop.f32.mrb[0].mxu0
      %412 = vdwg.mxu0
      %413 = vst.msk [vmem:[%s261] sm:$0xff] %vm335, %v383
      %414 = vst.msk [vmem:[%s261 + $0x8] sm:$0xff] %vm335, %v386
      %415 = vst.msk [vmem:[%s261 + $0x10] sm:$0xff] %vm335, %v391
      %416 = vst.msk [vmem:[%s261 + $0x18] sm:$0xff] %vm335, %v394
      %417 = vst.msk [vmem:[%s261 + $0x20] sm:$0xff] %vm335, %v399
      %418 = vst.msk [vmem:[%s261 + $0x28] sm:$0xff] %vm335, %v402
      %419 = vst.msk [vmem:[%s261 + $0x30] sm:$0xff] %vm335, %v407
      %420 = vst.msk [vmem:[%s261 + $0x38] sm:$0xff] %vm335, %v410
      %v421 = vld [vmem:[%s247] sm:$0xf]
      %v422 = vld [vmem:[%s247 + $0x4] sm:$0xf]
      %v423 = vld [vmem:[%s247 + $0x8] sm:$0xf]
      %v424 = vld [vmem:[%s247 + $0xc] sm:$0xf]
      %v425 = vld [vmem:[%s247 + $0x10] sm:$0xf]
      %v426 = vld [vmem:[%s247 + $0x14] sm:$0xf]
      %v427 = vld [vmem:[%s247 + $0x18] sm:$0xf]
      %v428 = vld [vmem:[%s247 + $0x1c] sm:$0xf]
      %v429 = vld [vmem:[%s252 + $0x20] sm:$0xf]
      %v430 = vld [vmem:[%s252 + $0x24] sm:$0xf]
      %v431 = vld [vmem:[%s252 + $0x28] sm:$0xf]
      %v432 = vld [vmem:[%s252 + $0x2c] sm:$0xf]
      %v433 = vld [vmem:[%s252 + $0x30] sm:$0xf]
      %v434 = vld [vmem:[%s252 + $0x34] sm:$0xf]
      %v435 = vld [vmem:[%s252 + $0x38] sm:$0xf]
      %v436 = vld [vmem:[%s252 + $0x3c] sm:$0xf]
      %v438 = vlaneseq
      %v439 = vshrl.u32 %v438, 7
      %v440 = vsub.s32 0, %v439
      %v441 = vrot.slane %v282, %v440
      %v451 = vunpack.c.l.b16 %v421
      %v452 = vunpack.c.l.b16 %v422
      %v453 = vunpack.c.l.b16 %v423
      %v454 = vunpack.c.l.b16 %v424
      %v455 = vunpack.c.l.b16 %v425
      %v456 = vunpack.c.l.b16 %v426
      %v457 = vunpack.c.l.b16 %v427
      %v458 = vunpack.c.l.b16 %v428
      %v459 = vpack.c.b16 %v452, %v451
      %v460 = vpack.c.b16 %v454, %v453
      %v461 = vpack.c.b16 %v456, %v455
      %v462 = vpack.c.b16 %v458, %v457
      %v467 = vunpack.c.l.b16 %v263
      %v468 = vunpack.c.l.b16 %v264
      %v469 = vunpack.c.l.b16 %v265
      %v470 = vunpack.c.l.b16 %v266
      %v471 = vpack.c.b16 %v468, %v467
      %v472 = vpack.c.b16 %v470, %v469
      %v476 = vsel %vm335, %v459, 0
      %v479 = vsel %vm335, %v460, 0
      %v482 = vsel %vm335, %v461, 0
      %v485 = vsel %vm335, %v462, 0
      %487 = vmatprep.subr.bf16.mxu0 0
      %488 = vmatpush1.bf16.msra.mxu0 %v471
      %489 = vmatprep.subr.bf16.mxu0 0
      %490 = vmatpush1.bf16.msra.mxu0 %v472
      %491 = vmatprep.subr.bf16.mxu0 0
      %492 = vmatpush1.bf16.msra.mxu0 0
      %493 = vmatprep.subr.bf16.mxu0 0
      %494 = vmatpush1.bf16.msra.mxu0 0
      %495 = vmatprep.subr.bf16.mxu0 0
      %496 = vmatpush1.bf16.msra.mxu0 0
      %497 = vmatprep.subr.bf16.mxu0 0
      %498 = vmatpush1.bf16.msra.mxu0 0
      %499 = vmatprep.subr.bf16.mxu0 0
      %500 = vmatpush1.bf16.msra.mxu0 0
      %501 = vmatprep.subr.bf16.mxu0 0
      %502 = vmatpush1.bf16.msra.mxu0 0
      %503 = vmatprep.subr.bf16.mxu0 0
      %504 = vmatpush1.bf16.msra.mxu0 0
      %505 = vmatprep.subr.bf16.mxu0 0
      %506 = vmatpush1.bf16.msra.mxu0 0
      %507 = vmatprep.subr.bf16.mxu0 0
      %508 = vmatpush1.bf16.msra.mxu0 0
      %509 = vmatprep.subr.bf16.mxu0 0
      %510 = vmatpush1.bf16.msra.mxu0 0
      %511 = vmatprep.subr.bf16.mxu0 0
      %512 = vmatpush1.bf16.msra.mxu0 0
      %513 = vmatprep.subr.bf16.mxu0 0
      %514 = vmatpush1.bf16.msra.mxu0 0
      %515 = vmatprep.subr.bf16.mxu0 0
      %516 = vmatpush1.bf16.msra.mxu0 0
      %517 = vmatprep.subr.bf16.mxu0 0
      %518 = vmatpush1.bf16.msra.mxu0 0
      %519 = vmatprep.mubr.bf16.mxu0 0
      %520 = vmatmul.mubr.bf16.gmra.mrb[0].mxu0 %v476
      %v521 = vpop.f32.mrb[0].mxu0
      %v522 = vadd.f32 %v441, %v521
      %v523 = vpop.f32.mrb[0].mxu0
      %v524 = vpop.f32.mrb[0].mxu0
      %v525 = vadd.f32 %v441, %v524
      %v526 = vpop.f32.mrb[0].mxu0
      %527 = vmatprep.mubr.bf16.mxu0 0
      %528 = vmatmul.mubr.bf16.gmra.mrb[0].mxu0 %v479
      %v529 = vpop.f32.mrb[0].mxu0
      %v530 = vadd.f32 %v441, %v529
      %v531 = vpop.f32.mrb[0].mxu0
      %v532 = vpop.f32.mrb[0].mxu0
      %v533 = vadd.f32 %v441, %v532
      %v534 = vpop.f32.mrb[0].mxu0
      %535 = vmatprep.mubr.bf16.mxu0 0
      %536 = vmatmul.mubr.bf16.gmra.mrb[0].mxu0 %v482
      %v537 = vpop.f32.mrb[0].mxu0
      %v538 = vadd.f32 %v441, %v537
      %v539 = vpop.f32.mrb[0].mxu0
      %v540 = vpop.f32.mrb[0].mxu0
      %v541 = vadd.f32 %v441, %v540
      %v542 = vpop.f32.mrb[0].mxu0
      %543 = vmatprep.mubr.bf16.mxu0 0
      %544 = vmatmul.mubr.bf16.gmra.mrb[0].mxu0 %v485
      %v545 = vpop.f32.mrb[0].mxu0
      %v546 = vadd.f32 %v441, %v545
      %v547 = vpop.f32.mrb[0].mxu0
      %v548 = vpop.f32.mrb[0].mxu0
      %v549 = vadd.f32 %v441, %v548
      %v550 = vpop.f32.mrb[0].mxu0
      %551 = vdwg.mxu0
      %v553 = vlaneseq
      %v554 = vshrl.u32 %v553, 7
      %v555 = vsub.s32 0, %v554
      %v556 = vrot.slane %v284, %v555
      %v566 = vunpack.c.l.b16 %v429
      %v567 = vunpack.c.l.b16 %v430
      %v568 = vunpack.c.l.b16 %v431
      %v569 = vunpack.c.l.b16 %v432
      %v570 = vunpack.c.l.b16 %v433
      %v571 = vunpack.c.l.b16 %v434
      %v572 = vunpack.c.l.b16 %v435
      %v573 = vunpack.c.l.b16 %v436
      %v574 = vpack.c.b16 %v567, %v566
      %v575 = vpack.c.b16 %v569, %v568
      %v576 = vpack.c.b16 %v571, %v570
      %v577 = vpack.c.b16 %v573, %v572
      %v582 = vunpack.c.l.b16 %v268
      %v583 = vunpack.c.l.b16 %v269
      %v584 = vunpack.c.l.b16 %v270
      %v585 = vunpack.c.l.b16 %v271
      %v586 = vpack.c.b16 %v583, %v582
      %v587 = vpack.c.b16 %v585, %v584
      %v591 = vsel %vm335, %v574, 0
      %v594 = vsel %vm335, %v575, 0
      %v597 = vsel %vm335, %v576, 0
      %v600 = vsel %vm335, %v577, 0
      %602 = vmatprep.subr.bf16.mxu0 0
      %603 = vmatpush1.bf16.msra.mxu0 %v586
      %604 = vmatprep.subr.bf16.mxu0 0
      %605 = vmatpush1.bf16.msra.mxu0 %v587
      %606 = vmatprep.subr.bf16.mxu0 0
      %607 = vmatpush1.bf16.msra.mxu0 0
      %608 = vmatprep.subr.bf16.mxu0 0
      %609 = vmatpush1.bf16.msra.mxu0 0
      %610 = vmatprep.subr.bf16.mxu0 0
      %611 = vmatpush1.bf16.msra.mxu0 0
      %612 = vmatprep.subr.bf16.mxu0 0
      %613 = vmatpush1.bf16.msra.mxu0 0
      %614 = vmatprep.subr.bf16.mxu0 0
      %615 = vmatpush1.bf16.msra.mxu0 0
      %616 = vmatprep.subr.bf16.mxu0 0
      %617 = vmatpush1.bf16.msra.mxu0 0
      %618 = vmatprep.subr.bf16.mxu0 0
      %619 = vmatpush1.bf16.msra.mxu0 0
      %620 = vmatprep.subr.bf16.mxu0 0
      %621 = vmatpush1.bf16.msra.mxu0 0
      %622 = vmatprep.subr.bf16.mxu0 0
      %623 = vmatpush1.bf16.msra.mxu0 0
      %624 = vmatprep.subr.bf16.mxu0 0
      %625 = vmatpush1.bf16.msra.mxu0 0
      %626 = vmatprep.subr.bf16.mxu0 0
      %627 = vmatpush1.bf16.msra.mxu0 0
      %628 = vmatprep.subr.bf16.mxu0 0
      %629 = vmatpush1.bf16.msra.mxu0 0
      %630 = vmatprep.subr.bf16.mxu0 0
      %631 = vmatpush1.bf16.msra.mxu0 0
      %632 = vmatprep.subr.bf16.mxu0 0
      %633 = vmatpush1.bf16.msra.mxu0 0
      %634 = vmatprep.mubr.bf16.mxu0 0
      %635 = vmatmul.mubr.bf16.gmra.mrb[0].mxu0 %v591
      %v636 = vpop.f32.mrb[0].mxu0
      %v637 = vadd.f32 %v556, %v636
      %v638 = vpop.f32.mrb[0].mxu0
      %v639 = vpop.f32.mrb[0].mxu0
      %v640 = vadd.f32 %v556, %v639
      %v641 = vpop.f32.mrb[0].mxu0
      %642 = vmatprep.mubr.bf16.mxu0 0
      %643 = vmatmul.mubr.bf16.gmra.mrb[0].mxu0 %v594
      %v644 = vpop.f32.mrb[0].mxu0
      %v645 = vadd.f32 %v556, %v644
      %v646 = vpop.f32.mrb[0].mxu0
      %v647 = vpop.f32.mrb[0].mxu0
      %v648 = vadd.f32 %v556, %v647
      %v649 = vpop.f32.mrb[0].mxu0
      %650 = vmatprep.mubr.bf16.mxu0 0
      %651 = vmatmul.mubr.bf16.gmra.mrb[0].mxu0 %v597
      %v652 = vpop.f32.mrb[0].mxu0
      %v653 = vadd.f32 %v556, %v652
      %v654 = vpop.f32.mrb[0].mxu0
      %v655 = vpop.f32.mrb[0].mxu0
      %v656 = vadd.f32 %v556, %v655
      %v657 = vpop.f32.mrb[0].mxu0
      %658 = vmatprep.mubr.bf16.mxu0 0
      %659 = vmatmul.mubr.bf16.gmra.mrb[0].mxu0 %v600
      %v660 = vpop.f32.mrb[0].mxu0
      %v661 = vadd.f32 %v556, %v660
      %v662 = vpop.f32.mrb[0].mxu0
      %v663 = vpop.f32.mrb[0].mxu0
      %v664 = vadd.f32 %v556, %v663
      %v665 = vpop.f32.mrb[0].mxu0
      %666 = vdwg.mxu0
      %v667 = vpack.c.bf16 %v522, %v522
      %v668 = vpack.c.bf16 %v525, %v525
      %v669 = vpack.c.bf16 %v530, %v530
      %v670 = vpack.c.bf16 %v533, %v533
      %v671 = vpack.c.bf16 %v538, %v538
      %v672 = vpack.c.bf16 %v541, %v541
      %v673 = vpack.c.bf16 %v546, %v546
      %v674 = vpack.c.bf16 %v549, %v549
      %v675 = vpack.c.bf16 %v637, %v637
      %v676 = vpack.c.bf16 %v640, %v640
      %v677 = vpack.c.bf16 %v645, %v645
      %v678 = vpack.c.bf16 %v648, %v648
      %v679 = vpack.c.bf16 %v653, %v653
      %v680 = vpack.c.bf16 %v656, %v656
      %v681 = vpack.c.bf16 %v661, %v661
      %v682 = vpack.c.bf16 %v664, %v664
      %v684 = vsel %vm335, %v667, 0
      %v687 = vsel %vm335, %v675, 0
      %689 = vmatprep.subr.bf16.mxu0 0
      %690 = vmatpush1.bf16.xpose.msra.mxu0 %v687
      %691 = vmatprep.subr.bf16.mxu0 0
      %692 = vmatpush1.bf16.xpose.msra.mxu0 0
      %693 = vmatprep.subr.bf16.mxu0 0
      %694 = vmatpush1.bf16.xpose.msra.mxu0 0
      %695 = vmatprep.subr.bf16.mxu0 0
      %696 = vmatpush1.bf16.xpose.msra.mxu0 0
      %697 = vmatprep.subr.bf16.mxu0 0
      %698 = vmatpush1.bf16.xpose.msra.mxu0 0
      %699 = vmatprep.subr.bf16.mxu0 0
      %700 = vmatpush1.bf16.xpose.msra.mxu0 0
      %701 = vmatprep.subr.bf16.mxu0 0
      %702 = vmatpush1.bf16.xpose.msra.mxu0 0
      %703 = vmatprep.subr.bf16.mxu0 0
      %704 = vmatpush1.bf16.xpose.msra.mxu0 0
      %705 = vmatprep.subr.bf16.mxu0 0
      %706 = vmatpush1.bf16.xpose.msra.mxu0 0
      %707 = vmatprep.subr.bf16.mxu0 0
      %708 = vmatpush1.bf16.xpose.msra.mxu0 0
      %709 = vmatprep.subr.bf16.mxu0 0
      %710 = vmatpush1.bf16.xpose.msra.mxu0 0
      %711 = vmatprep.subr.bf16.mxu0 0
      %712 = vmatpush1.bf16.xpose.msra.mxu0 0
      %713 = vmatprep.subr.bf16.mxu0 0
      %714 = vmatpush1.bf16.xpose.msra.mxu0 0
      %715 = vmatprep.subr.bf16.mxu0 0
      %716 = vmatpush1.bf16.xpose.msra.mxu0 0
      %717 = vmatprep.subr.bf16.mxu0 0
      %718 = vmatpush1.bf16.xpose.msra.mxu0 0
      %719 = vmatprep.subr.bf16.mxu0 0
      %720 = vmatpush1.bf16.xpose.msra.mxu0 0
      %721 = vmatprep.mubr.bf16.mxu0 0
      %722 = vmatmul.mubr.bf16.gmra.mrb[0].mxu0 %v684
      %v723 = vpop.f32.mrb[0].mxu0
      %v724 = vadd.f32 0.0, %v723
      %v725 = vpop.f32.mrb[0].mxu0
      %v726 = vpop.f32.mrb[0].mxu0
      %v727 = vpop.f32.mrb[0].mxu0
      %728 = vdwg.mxu0
      %v730 = vsel %vm335, %v668, 0
      %v733 = vsel %vm335, %v676, 0
      %735 = vmatprep.subr.bf16.mxu0 0
      %736 = vmatpush1.bf16.xpose.msra.mxu0 %v733
      %737 = vmatprep.subr.bf16.mxu0 0
      %738 = vmatpush1.bf16.xpose.msra.mxu0 0
      %739 = vmatprep.subr.bf16.mxu0 0
      %740 = vmatpush1.bf16.xpose.msra.mxu0 0
      %741 = vmatprep.subr.bf16.mxu0 0
      %742 = vmatpush1.bf16.xpose.msra.mxu0 0
      %743 = vmatprep.subr.bf16.mxu0 0
      %744 = vmatpush1.bf16.xpose.msra.mxu0 0
      %745 = vmatprep.subr.bf16.mxu0 0
      %746 = vmatpush1.bf16.xpose.msra.mxu0 0
      %747 = vmatprep.subr.bf16.mxu0 0
      %748 = vmatpush1.bf16.xpose.msra.mxu0 0
      %749 = vmatprep.subr.bf16.mxu0 0
      %750 = vmatpush1.bf16.xpose.msra.mxu0 0
      %751 = vmatprep.subr.bf16.mxu0 0
      %752 = vmatpush1.bf16.xpose.msra.mxu0 0
      %753 = vmatprep.subr.bf16.mxu0 0
      %754 = vmatpush1.bf16.xpose.msra.mxu0 0
      %755 = vmatprep.subr.bf16.mxu0 0
      %756 = vmatpush1.bf16.xpose.msra.mxu0 0
      %757 = vmatprep.subr.bf16.mxu0 0
      %758 = vmatpush1.bf16.xpose.msra.mxu0 0
      %759 = vmatprep.subr.bf16.mxu0 0
      %760 = vmatpush1.bf16.xpose.msra.mxu0 0
      %761 = vmatprep.subr.bf16.mxu0 0
      %762 = vmatpush1.bf16.xpose.msra.mxu0 0
      %763 = vmatprep.subr.bf16.mxu0 0
      %764 = vmatpush1.bf16.xpose.msra.mxu0 0
      %765 = vmatprep.subr.bf16.mxu0 0
      %766 = vmatpush1.bf16.xpose.msra.mxu0 0
      %767 = vmatprep.mubr.bf16.mxu0 0
      %768 = vmatmul.mubr.bf16.gmra.mrb[0].mxu0 %v730
      %v769 = vpop.f32.mrb[0].mxu0
      %v770 = vadd.f32 0.0, %v769
      %v771 = vpop.f32.mrb[0].mxu0
      %v772 = vpop.f32.mrb[0].mxu0
      %v773 = vpop.f32.mrb[0].mxu0
      %774 = vdwg.mxu0
      %v776 = vsel %vm335, %v669, 0
      %v779 = vsel %vm335, %v677, 0
      %781 = vmatprep.subr.bf16.mxu0 0
      %782 = vmatpush1.bf16.xpose.msra.mxu0 %v779
      %783 = vmatprep.subr.bf16.mxu0 0
      %784 = vmatpush1.bf16.xpose.msra.mxu0 0
      %785 = vmatprep.subr.bf16.mxu0 0
      %786 = vmatpush1.bf16.xpose.msra.mxu0 0
      %787 = vmatprep.subr.bf16.mxu0 0
      %788 = vmatpush1.bf16.xpose.msra.mxu0 0
      %789 = vmatprep.subr.bf16.mxu0 0
      %790 = vmatpush1.bf16.xpose.msra.mxu0 0
      %791 = vmatprep.subr.bf16.mxu0 0
      %792 = vmatpush1.bf16.xpose.msra.mxu0 0
      %793 = vmatprep.subr.bf16.mxu0 0
      %794 = vmatpush1.bf16.xpose.msra.mxu0 0
      %795 = vmatprep.subr.bf16.mxu0 0
      %796 = vmatpush1.bf16.xpose.msra.mxu0 0
      %797 = vmatprep.subr.bf16.mxu0 0
      %798 = vmatpush1.bf16.xpose.msra.mxu0 0
      %799 = vmatprep.subr.bf16.mxu0 0
      %800 = vmatpush1.bf16.xpose.msra.mxu0 0
      %801 = vmatprep.subr.bf16.mxu0 0
      %802 = vmatpush1.bf16.xpose.msra.mxu0 0
      %803 = vmatprep.subr.bf16.mxu0 0
      %804 = vmatpush1.bf16.xpose.msra.mxu0 0
      %805 = vmatprep.subr.bf16.mxu0 0
      %806 = vmatpush1.bf16.xpose.msra.mxu0 0
      %807 = vmatprep.subr.bf16.mxu0 0
      %808 = vmatpush1.bf16.xpose.msra.mxu0 0
      %809 = vmatprep.subr.bf16.mxu0 0
      %810 = vmatpush1.bf16.xpose.msra.mxu0 0
      %811 = vmatprep.subr.bf16.mxu0 0
      %812 = vmatpush1.bf16.xpose.msra.mxu0 0
      %813 = vmatprep.mubr.bf16.mxu0 0
      %814 = vmatmul.mubr.bf16.gmra.mrb[0].mxu0 %v776
      %v815 = vpop.f32.mrb[0].mxu0
      %v816 = vadd.f32 0.0, %v815
      %v817 = vpop.f32.mrb[0].mxu0
      %v818 = vpop.f32.mrb[0].mxu0
      %v819 = vpop.f32.mrb[0].mxu0
      %820 = vdwg.mxu0
      %v822 = vsel %vm335, %v670, 0
      %v825 = vsel %vm335, %v678, 0
      %827 = vmatprep.subr.bf16.mxu0 0
      %828 = vmatpush1.bf16.xpose.msra.mxu0 %v825
      %829 = vmatprep.subr.bf16.mxu0 0
      %830 = vmatpush1.bf16.xpose.msra.mxu0 0
      %831 = vmatprep.subr.bf16.mxu0 0
      %832 = vmatpush1.bf16.xpose.msra.mxu0 0
      %833 = vmatprep.subr.bf16.mxu0 0
      %834 = vmatpush1.bf16.xpose.msra.mxu0 0
      %835 = vmatprep.subr.bf16.mxu0 0
      %836 = vmatpush1.bf16.xpose.msra.mxu0 0
      %837 = vmatprep.subr.bf16.mxu0 0
      %838 = vmatpush1.bf16.xpose.msra.mxu0 0
      %839 = vmatprep.subr.bf16.mxu0 0
      %840 = vmatpush1.bf16.xpose.msra.mxu0 0
      %841 = vmatprep.subr.bf16.mxu0 0
      %842 = vmatpush1.bf16.xpose.msra.mxu0 0
      %843 = vmatprep.subr.bf16.mxu0 0
      %844 = vmatpush1.bf16.xpose.msra.mxu0 0
      %845 = vmatprep.subr.bf16.mxu0 0
      %846 = vmatpush1.bf16.xpose.msra.mxu0 0
      %847 = vmatprep.subr.bf16.mxu0 0
      %848 = vmatpush1.bf16.xpose.msra.mxu0 0
      %849 = vmatprep.subr.bf16.mxu0 0
      %850 = vmatpush1.bf16.xpose.msra.mxu0 0
      %851 = vmatprep.subr.bf16.mxu0 0
      %852 = vmatpush1.bf16.xpose.msra.mxu0 0
      %853 = vmatprep.subr.bf16.mxu0 0
      %854 = vmatpush1.bf16.xpose.msra.mxu0 0
      %855 = vmatprep.subr.bf16.mxu0 0
      %856 = vmatpush1.bf16.xpose.msra.mxu0 0
      %857 = vmatprep.subr.bf16.mxu0 0
      %858 = vmatpush1.bf16.xpose.msra.mxu0 0
      %859 = vmatprep.mubr.bf16.mxu0 0
      %860 = vmatmul.mubr.bf16.gmra.mrb[0].mxu0 %v822
      %v861 = vpop.f32.mrb[0].mxu0
      %v862 = vadd.f32 0.0, %v861
      %v863 = vpop.f32.mrb[0].mxu0
      %v864 = vpop.f32.mrb[0].mxu0
      %v865 = vpop.f32.mrb[0].mxu0
      %866 = vdwg.mxu0
      %v868 = vsel %vm335, %v671, 0
      %v871 = vsel %vm335, %v679, 0
      %873 = vmatprep.subr.bf16.mxu0 0
      %874 = vmatpush1.bf16.xpose.msra.mxu0 %v871
      %875 = vmatprep.subr.bf16.mxu0 0
      %876 = vmatpush1.bf16.xpose.msra.mxu0 0
      %877 = vmatprep.subr.bf16.mxu0 0
      %878 = vmatpush1.bf16.xpose.msra.mxu0 0
      %879 = vmatprep.subr.bf16.mxu0 0
      %880 = vmatpush1.bf16.xpose.msra.mxu0 0
      %881 = vmatprep.subr.bf16.mxu0 0
      %882 = vmatpush1.bf16.xpose.msra.mxu0 0
      %883 = vmatprep.subr.bf16.mxu0 0
      %884 = vmatpush1.bf16.xpose.msra.mxu0 0
      %885 = vmatprep.subr.bf16.mxu0 0
      %886 = vmatpush1.bf16.xpose.msra.mxu0 0
      %887 = vmatprep.subr.bf16.mxu0 0
      %888 = vmatpush1.bf16.xpose.msra.mxu0 0
      %889 = vmatprep.subr.bf16.mxu0 0
      %890 = vmatpush1.bf16.xpose.msra.mxu0 0
      %891 = vmatprep.subr.bf16.mxu0 0
      %892 = vmatpush1.bf16.xpose.msra.mxu0 0
      %893 = vmatprep.subr.bf16.mxu0 0
      %894 = vmatpush1.bf16.xpose.msra.mxu0 0
      %895 = vmatprep.subr.bf16.mxu0 0
      %896 = vmatpush1.bf16.xpose.msra.mxu0 0
      %897 = vmatprep.subr.bf16.mxu0 0
      %898 = vmatpush1.bf16.xpose.msra.mxu0 0
      %899 = vmatprep.subr.bf16.mxu0 0
      %900 = vmatpush1.bf16.xpose.msra.mxu0 0
      %901 = vmatprep.subr.bf16.mxu0 0
      %902 = vmatpush1.bf16.xpose.msra.mxu0 0
      %903 = vmatprep.subr.bf16.mxu0 0
      %904 = vmatpush1.bf16.xpose.msra.mxu0 0
      %905 = vmatprep.mubr.bf16.mxu0 0
      %906 = vmatmul.mubr.bf16.gmra.mrb[0].mxu0 %v868
      %v907 = vpop.f32.mrb[0].mxu0
      %v908 = vadd.f32 0.0, %v907
      %v909 = vpop.f32.mrb[0].mxu0
      %v910 = vpop.f32.mrb[0].mxu0
      %v911 = vpop.f32.mrb[0].mxu0
      %912 = vdwg.mxu0
      %v914 = vsel %vm335, %v672, 0
      %v917 = vsel %vm335, %v680, 0
      %919 = vmatprep.subr.bf16.mxu0 0
      %920 = vmatpush1.bf16.xpose.msra.mxu0 %v917
      %921 = vmatprep.subr.bf16.mxu0 0
      %922 = vmatpush1.bf16.xpose.msra.mxu0 0
      %923 = vmatprep.subr.bf16.mxu0 0
      %924 = vmatpush1.bf16.xpose.msra.mxu0 0
      %925 = vmatprep.subr.bf16.mxu0 0
      %926 = vmatpush1.bf16.xpose.msra.mxu0 0
      %927 = vmatprep.subr.bf16.mxu0 0
      %928 = vmatpush1.bf16.xpose.msra.mxu0 0
      %929 = vmatprep.subr.bf16.mxu0 0
      %930 = vmatpush1.bf16.xpose.msra.mxu0 0
      %931 = vmatprep.subr.bf16.mxu0 0
      %932 = vmatpush1.bf16.xpose.msra.mxu0 0
      %933 = vmatprep.subr.bf16.mxu0 0
      %934 = vmatpush1.bf16.xpose.msra.mxu0 0
      %935 = vmatprep.subr.bf16.mxu0 0
      %936 = vmatpush1.bf16.xpose.msra.mxu0 0
      %937 = vmatprep.subr.bf16.mxu0 0
      %938 = vmatpush1.bf16.xpose.msra.mxu0 0
      %939 = vmatprep.subr.bf16.mxu0 0
      %940 = vmatpush1.bf16.xpose.msra.mxu0 0
      %941 = vmatprep.subr.bf16.mxu0 0
      %942 = vmatpush1.bf16.xpose.msra.mxu0 0
      %943 = vmatprep.subr.bf16.mxu0 0
      %944 = vmatpush1.bf16.xpose.msra.mxu0 0
      %945 = vmatprep.subr.bf16.mxu0 0
      %946 = vmatpush1.bf16.xpose.msra.mxu0 0
      %947 = vmatprep.subr.bf16.mxu0 0
      %948 = vmatpush1.bf16.xpose.msra.mxu0 0
      %949 = vmatprep.subr.bf16.mxu0 0
      %950 = vmatpush1.bf16.xpose.msra.mxu0 0
      %951 = vmatprep.mubr.bf16.mxu0 0
      %952 = vmatmul.mubr.bf16.gmra.mrb[0].mxu0 %v914
      %v953 = vpop.f32.mrb[0].mxu0
      %v954 = vadd.f32 0.0, %v953
      %v955 = vpop.f32.mrb[0].mxu0
      %v956 = vpop.f32.mrb[0].mxu0
      %v957 = vpop.f32.mrb[0].mxu0
      %958 = vdwg.mxu0
      %v960 = vsel %vm335, %v673, 0
      %v963 = vsel %vm335, %v681, 0
      %965 = vmatprep.subr.bf16.mxu0 0
      %966 = vmatpush1.bf16.xpose.msra.mxu0 %v963
      %967 = vmatprep.subr.bf16.mxu0 0
      %968 = vmatpush1.bf16.xpose.msra.mxu0 0
      %969 = vmatprep.subr.bf16.mxu0 0
      %970 = vmatpush1.bf16.xpose.msra.mxu0 0
      %971 = vmatprep.subr.bf16.mxu0 0
      %972 = vmatpush1.bf16.xpose.msra.mxu0 0
      %973 = vmatprep.subr.bf16.mxu0 0
      %974 = vmatpush1.bf16.xpose.msra.mxu0 0
      %975 = vmatprep.subr.bf16.mxu0 0
      %976 = vmatpush1.bf16.xpose.msra.mxu0 0
      %977 = vmatprep.subr.bf16.mxu0 0
      %978 = vmatpush1.bf16.xpose.msra.mxu0 0
      %979 = vmatprep.subr.bf16.mxu0 0
      %980 = vmatpush1.bf16.xpose.msra.mxu0 0
      %981 = vmatprep.subr.bf16.mxu0 0
      %982 = vmatpush1.bf16.xpose.msra.mxu0 0
      %983 = vmatprep.subr.bf16.mxu0 0
      %984 = vmatpush1.bf16.xpose.msra.mxu0 0
      %985 = vmatprep.subr.bf16.mxu0 0
      %986 = vmatpush1.bf16.xpose.msra.mxu0 0
      %987 = vmatprep.subr.bf16.mxu0 0
      %988 = vmatpush1.bf16.xpose.msra.mxu0 0
      %989 = vmatprep.subr.bf16.mxu0 0
      %990 = vmatpush1.bf16.xpose.msra.mxu0 0
      %991 = vmatprep.subr.bf16.mxu0 0
      %992 = vmatpush1.bf16.xpose.msra.mxu0 0
      %993 = vmatprep.subr.bf16.mxu0 0
      %994 = vmatpush1.bf16.xpose.msra.mxu0 0
      %995 = vmatprep.subr.bf16.mxu0 0
      %996 = vmatpush1.bf16.xpose.msra.mxu0 0
      %997 = vmatprep.mubr.bf16.mxu0 0
      %998 = vmatmul.mubr.bf16.gmra.mrb[0].mxu0 %v960
      %v999 = vpop.f32.mrb[0].mxu0
      %v1000 = vadd.f32 0.0, %v999
      %v1001 = vpop.f32.mrb[0].mxu0
      %v1002 = vpop.f32.mrb[0].mxu0
      %v1003 = vpop.f32.mrb[0].mxu0
      %1004 = vdwg.mxu0
      %v1006 = vsel %vm335, %v674, 0
      %v1009 = vsel %vm335, %v682, 0
      %1011 = vmatprep.subr.bf16.mxu0 0
      %1012 = vmatpush1.bf16.xpose.msra.mxu0 %v1009
      %1013 = vmatprep.subr.bf16.mxu0 0
      %1014 = vmatpush1.bf16.xpose.msra.mxu0 0
      %1015 = vmatprep.subr.bf16.mxu0 0
      %1016 = vmatpush1.bf16.xpose.msra.mxu0 0
      %1017 = vmatprep.subr.bf16.mxu0 0
      %1018 = vmatpush1.bf16.xpose.msra.mxu0 0
      %1019 = vmatprep.subr.bf16.mxu0 0
      %1020 = vmatpush1.bf16.xpose.msra.mxu0 0
      %1021 = vmatprep.subr.bf16.mxu0 0
      %1022 = vmatpush1.bf16.xpose.msra.mxu0 0
      %1023 = vmatprep.subr.bf16.mxu0 0
      %1024 = vmatpush1.bf16.xpose.msra.mxu0 0
      %1025 = vmatprep.subr.bf16.mxu0 0
      %1026 = vmatpush1.bf16.xpose.msra.mxu0 0
      %1027 = vmatprep.subr.bf16.mxu0 0
      %1028 = vmatpush1.bf16.xpose.msra.mxu0 0
      %1029 = vmatprep.subr.bf16.mxu0 0
      %1030 = vmatpush1.bf16.xpose.msra.mxu0 0
      %1031 = vmatprep.subr.bf16.mxu0 0
      %1032 = vmatpush1.bf16.xpose.msra.mxu0 0
      %1033 = vmatprep.subr.bf16.mxu0 0
      %1034 = vmatpush1.bf16.xpose.msra.mxu0 0
      %1035 = vmatprep.subr.bf16.mxu0 0
      %1036 = vmatpush1.bf16.xpose.msra.mxu0 0
      %1037 = vmatprep.subr.bf16.mxu0 0
      %1038 = vmatpush1.bf16.xpose.msra.mxu0 0
      %1039 = vmatprep.subr.bf16.mxu0 0
      %1040 = vmatpush1.bf16.xpose.msra.mxu0 0
      %1041 = vmatprep.subr.bf16.mxu0 0
      %1042 = vmatpush1.bf16.xpose.msra.mxu0 0
      %1043 = vmatprep.mubr.bf16.mxu0 0
      %1044 = vmatmul.mubr.bf16.gmra.mrb[0].mxu0 %v1006
      %v1045 = vpop.f32.mrb[0].mxu0
      %v1046 = vadd.f32 0.0, %v1045
      %v1047 = vpop.f32.mrb[0].mxu0
      %v1048 = vpop.f32.mrb[0].mxu0
      %v1049 = vpop.f32.mrb[0].mxu0
      %1050 = vdwg.mxu0
      %v1051 = vld [vmem:[%s256] sm:$0xff]
      %vm1052 = vcmp.gt.f32.partialorder %v1051, 0.0
      %v1053 = vsel %vm1052, 1, 0
      %vm1054 = vcmp.eq.s32.totalorder %v1053, 1
      %v1055 = vsel %vm1054, %v724, -1e+30
      %v1056 = vsel %vm1054, %v770, -1e+30
      %v1057 = vsel %vm1054, %v816, -1e+30
      %v1058 = vsel %vm1054, %v862, -1e+30
      %v1059 = vsel %vm1054, %v908, -1e+30
      %v1060 = vsel %vm1054, %v954, -1e+30
      %v1061 = vsel %vm1054, %v1000, -1e+30
      %v1062 = vsel %vm1054, %v1046, -1e+30
      %vm1063 = vcmask 64512
      %v1064 = vsel %vm1063, %v1055, -inf
      %1065 = vmax.xlane.f32.xlu0 %v1064
      %v1066 = vpop.xlane.xlu0 %1065
      %v1067 = vsel %vm1063, %v1056, -inf
      %1068 = vmax.xlane.f32.xlu0 %v1067
      %v1069 = vpop.xlane.xlu0 %1068
      %v1070 = vsel %vm1063, %v1057, -inf
      %1071 = vmax.xlane.f32.xlu0 %v1070
      %v1072 = vpop.xlane.xlu0 %1071
      %v1073 = vsel %vm1063, %v1058, -inf
      %1074 = vmax.xlane.f32.xlu0 %v1073
      %v1075 = vpop.xlane.xlu0 %1074
      %v1076 = vsel %vm1063, %v1059, -inf
      %1077 = vmax.xlane.f32.xlu0 %v1076
      %v1078 = vpop.xlane.xlu0 %1077
      %v1079 = vsel %vm1063, %v1060, -inf
      %1080 = vmax.xlane.f32.xlu0 %v1079
      %v1081 = vpop.xlane.xlu0 %1080
      %v1082 = vsel %vm1063, %v1061, -inf
      %1083 = vmax.xlane.f32.xlu0 %v1082
      %v1084 = vpop.xlane.xlu0 %1083
      %v1085 = vsel %vm1063, %v1062, -inf
      %1086 = vmax.xlane.f32.xlu0 %v1085
      %v1087 = vpop.xlane.xlu0 %1086
      %v1088 = vsub.f32 %v1055, %v1066
      %v1089 = vsub.f32 %v1056, %v1069
      %v1090 = vsub.f32 %v1057, %v1072
      %v1091 = vsub.f32 %v1058, %v1075
      %v1092 = vsub.f32 %v1059, %v1078
      %v1093 = vsub.f32 %v1060, %v1081
      %v1094 = vsub.f32 %v1061, %v1084
      %v1095 = vsub.f32 %v1062, %v1087
      %v1096 = vmul.f32 %v1088, 1.442695
      %v1097 = vpow.pop %v1096
      %v1098 = vmul.f32 %v1089, 1.442695
      %v1099 = vpow.pop %v1098
      %v1100 = vmul.f32 %v1090, 1.442695
      %v1101 = vpow.pop %v1100
      %v1102 = vmul.f32 %v1091, 1.442695
      %v1103 = vpow.pop %v1102
      %v1104 = vmul.f32 %v1092, 1.442695
      %v1105 = vpow.pop %v1104
      %v1106 = vmul.f32 %v1093, 1.442695
      %v1107 = vpow.pop %v1106
      %v1108 = vmul.f32 %v1094, 1.442695
      %v1109 = vpow.pop %v1108
      %v1110 = vmul.f32 %v1095, 1.442695
      %v1111 = vpow.pop %v1110
      %v1112 = vmul.f32 %v1051, %v1097
      %v1113 = vmul.f32 %v1051, %v1099
      %v1114 = vmul.f32 %v1051, %v1101
      %v1115 = vmul.f32 %v1051, %v1103
      %v1116 = vmul.f32 %v1051, %v1105
      %v1117 = vmul.f32 %v1051, %v1107
      %v1118 = vmul.f32 %v1051, %v1109
      %v1119 = vmul.f32 %v1051, %v1111
      %v1120 = vsel %vm1063, %v1112, 0.0
      %1121 = vadd.xlane.f32.xlu0 %v1120
      %v1122 = vpop.xlane.xlu0 %1121
      %v1123 = vsel %vm1063, %v1113, 0.0
      %1124 = vadd.xlane.f32.xlu0 %v1123
      %v1125 = vpop.xlane.xlu0 %1124
      %v1126 = vsel %vm1063, %v1114, 0.0
      %1127 = vadd.xlane.f32.xlu0 %v1126
      %v1128 = vpop.xlane.xlu0 %1127
      %v1129 = vsel %vm1063, %v1115, 0.0
      %1130 = vadd.xlane.f32.xlu0 %v1129
      %v1131 = vpop.xlane.xlu0 %1130
      %v1132 = vsel %vm1063, %v1116, 0.0
      %1133 = vadd.xlane.f32.xlu0 %v1132
      %v1134 = vpop.xlane.xlu0 %1133
      %v1135 = vsel %vm1063, %v1117, 0.0
      %1136 = vadd.xlane.f32.xlu0 %v1135
      %v1137 = vpop.xlane.xlu0 %1136
      %v1138 = vsel %vm1063, %v1118, 0.0
      %1139 = vadd.xlane.f32.xlu0 %v1138
      %v1140 = vpop.xlane.xlu0 %1139
      %v1141 = vsel %vm1063, %v1119, 0.0
      %1142 = vadd.xlane.f32.xlu0 %v1141
      %v1143 = vpop.xlane.xlu0 %1142
      %v1144 = vrcp.pop %v1122
      %v1145 = vrcp.pop %v1125
      %v1146 = vrcp.pop %v1128
      %v1147 = vrcp.pop %v1131
      %v1148 = vrcp.pop %v1134
      %v1149 = vrcp.pop %v1137
      %v1150 = vrcp.pop %v1140
      %v1151 = vrcp.pop %v1143
      %v1152 = vmul.f32 %v1112, %v1144
      %v1153 = vmul.f32 %v1113, %v1145
      %v1154 = vmul.f32 %v1114, %v1146
      %v1155 = vmul.f32 %v1115, %v1147
      %v1156 = vmul.f32 %v1116, %v1148
      %v1157 = vmul.f32 %v1117, %v1149
      %v1158 = vmul.f32 %v1118, %v1150
      %v1159 = vmul.f32 %v1119, %v1151
      %v1160 = vpack.c.bf16 %v1152, %v1152
      %v1161 = vpack.c.bf16 %v1153, %v1153
      %v1162 = vpack.c.bf16 %v1154, %v1154
      %v1163 = vpack.c.bf16 %v1155, %v1155
      %v1164 = vpack.c.bf16 %v1156, %v1156
      %v1165 = vpack.c.bf16 %v1157, %v1157
      %v1166 = vpack.c.bf16 %v1158, %v1158
      %v1167 = vpack.c.bf16 %v1159, %v1159
      %v1169 = vsel %vm1063, %v1160, 0
      %vm1171 = vcmask 1043456
      %v1172 = vsel %vm1171, %v675, 0
      %1174 = vmatprep.subr.bf16.mxu0 0
      %1175 = vmatpush1.bf16.msra.mxu0 %v1172
      %1176 = vmatprep.subr.bf16.mxu0 0
      %1177 = vmatpush1.bf16.msra.mxu0 0
      %1178 = vmatprep.subr.bf16.mxu0 0
      %1179 = vmatpush1.bf16.msra.mxu0 0
      %1180 = vmatprep.subr.bf16.mxu0 0
      %1181 = vmatpush1.bf16.msra.mxu0 0
      %1182 = vmatprep.subr.bf16.mxu0 0
      %1183 = vmatpush1.bf16.msra.mxu0 0
      %1184 = vmatprep.subr.bf16.mxu0 0
      %1185 = vmatpush1.bf16.msra.mxu0 0
      %1186 = vmatprep.subr.bf16.mxu0 0
      %1187 = vmatpush1.bf16.msra.mxu0 0
      %1188 = vmatprep.subr.bf16.mxu0 0
      %1189 = vmatpush1.bf16.msra.mxu0 0
      %1190 = vmatprep.subr.bf16.mxu0 0
      %1191 = vmatpush1.bf16.msra.mxu0 0
      %1192 = vmatprep.subr.bf16.mxu0 0
      %1193 = vmatpush1.bf16.msra.mxu0 0
      %1194 = vmatprep.subr.bf16.mxu0 0
      %1195 = vmatpush1.bf16.msra.mxu0 0
      %1196 = vmatprep.subr.bf16.mxu0 0
      %1197 = vmatpush1.bf16.msra.mxu0 0
      %1198 = vmatprep.subr.bf16.mxu0 0
      %1199 = vmatpush1.bf16.msra.mxu0 0
      %1200 = vmatprep.subr.bf16.mxu0 0
      %1201 = vmatpush1.bf16.msra.mxu0 0
      %1202 = vmatprep.subr.bf16.mxu0 0
      %1203 = vmatpush1.bf16.msra.mxu0 0
      %1204 = vmatprep.subr.bf16.mxu0 0
      %1205 = vmatpush1.bf16.msra.mxu0 0
      %1206 = vmatprep.mubr.bf16.mxu0 0
      %1207 = vmatmul.mubr.bf16.gmra.mrb[0].mxu0 %v1169
      %v1208 = vpop.f32.mrb[0].mxu0
      %v1209 = vadd.f32 0.0, %v1208
      %v1210 = vpop.f32.mrb[0].mxu0
      %v1211 = vpop.f32.mrb[0].mxu0
      %v1212 = vpop.f32.mrb[0].mxu0
      %1213 = vdwg.mxu0
      %v1215 = vsel %vm1063, %v1161, 0
      %v1217 = vsel %vm1171, %v676, 0
      %1219 = vmatprep.subr.bf16.mxu0 0
      %1220 = vmatpush1.bf16.msra.mxu0 %v1217
      %1221 = vmatprep.subr.bf16.mxu0 0
      %1222 = vmatpush1.bf16.msra.mxu0 0
      %1223 = vmatprep.subr.bf16.mxu0 0
      %1224 = vmatpush1.bf16.msra.mxu0 0
      %1225 = vmatprep.subr.bf16.mxu0 0
      %1226 = vmatpush1.bf16.msra.mxu0 0
      %1227 = vmatprep.subr.bf16.mxu0 0
      %1228 = vmatpush1.bf16.msra.mxu0 0
      %1229 = vmatprep.subr.bf16.mxu0 0
      %1230 = vmatpush1.bf16.msra.mxu0 0
      %1231 = vmatprep.subr.bf16.mxu0 0
      %1232 = vmatpush1.bf16.msra.mxu0 0
      %1233 = vmatprep.subr.bf16.mxu0 0
      %1234 = vmatpush1.bf16.msra.mxu0 0
      %1235 = vmatprep.subr.bf16.mxu0 0
      %1236 = vmatpush1.bf16.msra.mxu0 0
      %1237 = vmatprep.subr.bf16.mxu0 0
      %1238 = vmatpush1.bf16.msra.mxu0 0
      %1239 = vmatprep.subr.bf16.mxu0 0
      %1240 = vmatpush1.bf16.msra.mxu0 0
      %1241 = vmatprep.subr.bf16.mxu0 0
      %1242 = vmatpush1.bf16.msra.mxu0 0
      %1243 = vmatprep.subr.bf16.mxu0 0
      %1244 = vmatpush1.bf16.msra.mxu0 0
      %1245 = vmatprep.subr.bf16.mxu0 0
      %1246 = vmatpush1.bf16.msra.mxu0 0
      %1247 = vmatprep.subr.bf16.mxu0 0
      %1248 = vmatpush1.bf16.msra.mxu0 0
      %1249 = vmatprep.subr.bf16.mxu0 0
      %1250 = vmatpush1.bf16.msra.mxu0 0
      %1251 = vmatprep.mubr.bf16.mxu0 0
      %1252 = vmatmul.mubr.bf16.gmra.mrb[0].mxu0 %v1215
      %v1253 = vpop.f32.mrb[0].mxu0
      %v1254 = vadd.f32 0.0, %v1253
      %v1255 = vpop.f32.mrb[0].mxu0
      %v1256 = vpop.f32.mrb[0].mxu0
      %v1257 = vpop.f32.mrb[0].mxu0
      %1258 = vdwg.mxu0
      %v1260 = vsel %vm1063, %v1162, 0
      %v1262 = vsel %vm1171, %v677, 0
      %1264 = vmatprep.subr.bf16.mxu0 0
      %1265 = vmatpush1.bf16.msra.mxu0 %v1262
      %1266 = vmatprep.subr.bf16.mxu0 0
      %1267 = vmatpush1.bf16.msra.mxu0 0
      %1268 = vmatprep.subr.bf16.mxu0 0
      %1269 = vmatpush1.bf16.msra.mxu0 0
      %1270 = vmatprep.subr.bf16.mxu0 0
      %1271 = vmatpush1.bf16.msra.mxu0 0
      %1272 = vmatprep.subr.bf16.mxu0 0
      %1273 = vmatpush1.bf16.msra.mxu0 0
      %1274 = vmatprep.subr.bf16.mxu0 0
      %1275 = vmatpush1.bf16.msra.mxu0 0
      %1276 = vmatprep.subr.bf16.mxu0 0
      %1277 = vmatpush1.bf16.msra.mxu0 0
      %1278 = vmatprep.subr.bf16.mxu0 0
      %1279 = vmatpush1.bf16.msra.mxu0 0
      %1280 = vmatprep.subr.bf16.mxu0 0
      %1281 = vmatpush1.bf16.msra.mxu0 0
      %1282 = vmatprep.subr.bf16.mxu0 0
      %1283 = vmatpush1.bf16.msra.mxu0 0
      %1284 = vmatprep.subr.bf16.mxu0 0
      %1285 = vmatpush1.bf16.msra.mxu0 0
      %1286 = vmatprep.subr.bf16.mxu0 0
      %1287 = vmatpush1.bf16.msra.mxu0 0
      %1288 = vmatprep.subr.bf16.mxu0 0
      %1289 = vmatpush1.bf16.msra.mxu0 0
      %1290 = vmatprep.subr.bf16.mxu0 0
      %1291 = vmatpush1.bf16.msra.mxu0 0
      %1292 = vmatprep.subr.bf16.mxu0 0
      %1293 = vmatpush1.bf16.msra.mxu0 0
      %1294 = vmatprep.subr.bf16.mxu0 0
      %1295 = vmatpush1.bf16.msra.mxu0 0
      %1296 = vmatprep.mubr.bf16.mxu0 0
      %1297 = vmatmul.mubr.bf16.gmra.mrb[0].mxu0 %v1260
      %v1298 = vpop.f32.mrb[0].mxu0
      %v1299 = vadd.f32 0.0, %v1298
      %v1300 = vpop.f32.mrb[0].mxu0
      %v1301 = vpop.f32.mrb[0].mxu0
      %v1302 = vpop.f32.mrb[0].mxu0
      %1303 = vdwg.mxu0
      %v1305 = vsel %vm1063, %v1163, 0
      %v1307 = vsel %vm1171, %v678, 0
      %1309 = vmatprep.subr.bf16.mxu0 0
      %1310 = vmatpush1.bf16.msra.mxu0 %v1307
      %1311 = vmatprep.subr.bf16.mxu0 0
      %1312 = vmatpush1.bf16.msra.mxu0 0
      %1313 = vmatprep.subr.bf16.mxu0 0
      %1314 = vmatpush1.bf16.msra.mxu0 0
      %1315 = vmatprep.subr.bf16.mxu0 0
      %1316 = vmatpush1.bf16.msra.mxu0 0
      %1317 = vmatprep.subr.bf16.mxu0 0
      %1318 = vmatpush1.bf16.msra.mxu0 0
      %1319 = vmatprep.subr.bf16.mxu0 0
      %1320 = vmatpush1.bf16.msra.mxu0 0
      %1321 = vmatprep.subr.bf16.mxu0 0
      %1322 = vmatpush1.bf16.msra.mxu0 0
      %1323 = vmatprep.subr.bf16.mxu0 0
      %1324 = vmatpush1.bf16.msra.mxu0 0
      %1325 = vmatprep.subr.bf16.mxu0 0
      %1326 = vmatpush1.bf16.msra.mxu0 0
      %1327 = vmatprep.subr.bf16.mxu0 0
      %1328 = vmatpush1.bf16.msra.mxu0 0
      %1329 = vmatprep.subr.bf16.mxu0 0
      %1330 = vmatpush1.bf16.msra.mxu0 0
      %1331 = vmatprep.subr.bf16.mxu0 0
      %1332 = vmatpush1.bf16.msra.mxu0 0
      %1333 = vmatprep.subr.bf16.mxu0 0
      %1334 = vmatpush1.bf16.msra.mxu0 0
      %1335 = vmatprep.subr.bf16.mxu0 0
      %1336 = vmatpush1.bf16.msra.mxu0 0
      %1337 = vmatprep.subr.bf16.mxu0 0
      %1338 = vmatpush1.bf16.msra.mxu0 0
      %1339 = vmatprep.subr.bf16.mxu0 0
      %1340 = vmatpush1.bf16.msra.mxu0 0
      %1341 = vmatprep.mubr.bf16.mxu0 0
      %1342 = vmatmul.mubr.bf16.gmra.mrb[0].mxu0 %v1305
      %v1343 = vpop.f32.mrb[0].mxu0
      %v1344 = vadd.f32 0.0, %v1343
      %v1345 = vpop.f32.mrb[0].mxu0
      %v1346 = vpop.f32.mrb[0].mxu0
      %v1347 = vpop.f32.mrb[0].mxu0
      %1348 = vdwg.mxu0
      %v1350 = vsel %vm1063, %v1164, 0
      %v1352 = vsel %vm1171, %v679, 0
      %1354 = vmatprep.subr.bf16.mxu0 0
      %1355 = vmatpush1.bf16.msra.mxu0 %v1352
      %1356 = vmatprep.subr.bf16.mxu0 0
      %1357 = vmatpush1.bf16.msra.mxu0 0
      %1358 = vmatprep.subr.bf16.mxu0 0
      %1359 = vmatpush1.bf16.msra.mxu0 0
      %1360 = vmatprep.subr.bf16.mxu0 0
      %1361 = vmatpush1.bf16.msra.mxu0 0
      %1362 = vmatprep.subr.bf16.mxu0 0
      %1363 = vmatpush1.bf16.msra.mxu0 0
      %1364 = vmatprep.subr.bf16.mxu0 0
      %1365 = vmatpush1.bf16.msra.mxu0 0
      %1366 = vmatprep.subr.bf16.mxu0 0
      %1367 = vmatpush1.bf16.msra.mxu0 0
      %1368 = vmatprep.subr.bf16.mxu0 0
      %1369 = vmatpush1.bf16.msra.mxu0 0
      %1370 = vmatprep.subr.bf16.mxu0 0
      %1371 = vmatpush1.bf16.msra.mxu0 0
      %1372 = vmatprep.subr.bf16.mxu0 0
      %1373 = vmatpush1.bf16.msra.mxu0 0
      %1374 = vmatprep.subr.bf16.mxu0 0
      %1375 = vmatpush1.bf16.msra.mxu0 0
      %1376 = vmatprep.subr.bf16.mxu0 0
      %1377 = vmatpush1.bf16.msra.mxu0 0
      %1378 = vmatprep.subr.bf16.mxu0 0
      %1379 = vmatpush1.bf16.msra.mxu0 0
      %1380 = vmatprep.subr.bf16.mxu0 0
      %1381 = vmatpush1.bf16.msra.mxu0 0
      %1382 = vmatprep.subr.bf16.mxu0 0
      %1383 = vmatpush1.bf16.msra.mxu0 0
      %1384 = vmatprep.subr.bf16.mxu0 0
      %1385 = vmatpush1.bf16.msra.mxu0 0
      %1386 = vmatprep.mubr.bf16.mxu0 0
      %1387 = vmatmul.mubr.bf16.gmra.mrb[0].mxu0 %v1350
      %v1388 = vpop.f32.mrb[0].mxu0
      %v1389 = vadd.f32 0.0, %v1388
      %v1390 = vpop.f32.mrb[0].mxu0
      %v1391 = vpop.f32.mrb[0].mxu0
      %v1392 = vpop.f32.mrb[0].mxu0
      %1393 = vdwg.mxu0
      %v1395 = vsel %vm1063, %v1165, 0
      %v1397 = vsel %vm1171, %v680, 0
      %1399 = vmatprep.subr.bf16.mxu0 0
      %1400 = vmatpush1.bf16.msra.mxu0 %v1397
      %1401 = vmatprep.subr.bf16.mxu0 0
      %1402 = vmatpush1.bf16.msra.mxu0 0
      %1403 = vmatprep.subr.bf16.mxu0 0
      %1404 = vmatpush1.bf16.msra.mxu0 0
      %1405 = vmatprep.subr.bf16.mxu0 0
      %1406 = vmatpush1.bf16.msra.mxu0 0
      %1407 = vmatprep.subr.bf16.mxu0 0
      %1408 = vmatpush1.bf16.msra.mxu0 0
      %1409 = vmatprep.subr.bf16.mxu0 0
      %1410 = vmatpush1.bf16.msra.mxu0 0
      %1411 = vmatprep.subr.bf16.mxu0 0
      %1412 = vmatpush1.bf16.msra.mxu0 0
      %1413 = vmatprep.subr.bf16.mxu0 0
      %1414 = vmatpush1.bf16.msra.mxu0 0
      %1415 = vmatprep.subr.bf16.mxu0 0
      %1416 = vmatpush1.bf16.msra.mxu0 0
      %1417 = vmatprep.subr.bf16.mxu0 0
      %1418 = vmatpush1.bf16.msra.mxu0 0
      %1419 = vmatprep.subr.bf16.mxu0 0
      %1420 = vmatpush1.bf16.msra.mxu0 0
      %1421 = vmatprep.subr.bf16.mxu0 0
      %1422 = vmatpush1.bf16.msra.mxu0 0
      %1423 = vmatprep.subr.bf16.mxu0 0
      %1424 = vmatpush1.bf16.msra.mxu0 0
      %1425 = vmatprep.subr.bf16.mxu0 0
      %1426 = vmatpush1.bf16.msra.mxu0 0
      %1427 = vmatprep.subr.bf16.mxu0 0
      %1428 = vmatpush1.bf16.msra.mxu0 0
      %1429 = vmatprep.subr.bf16.mxu0 0
      %1430 = vmatpush1.bf16.msra.mxu0 0
      %1431 = vmatprep.mubr.bf16.mxu0 0
      %1432 = vmatmul.mubr.bf16.gmra.mrb[0].mxu0 %v1395
      %v1433 = vpop.f32.mrb[0].mxu0
      %v1434 = vadd.f32 0.0, %v1433
      %v1435 = vpop.f32.mrb[0].mxu0
      %v1436 = vpop.f32.mrb[0].mxu0
      %v1437 = vpop.f32.mrb[0].mxu0
      %1438 = vdwg.mxu0
      %v1440 = vsel %vm1063, %v1166, 0
      %v1442 = vsel %vm1171, %v681, 0
      %1444 = vmatprep.subr.bf16.mxu0 0
      %1445 = vmatpush1.bf16.msra.mxu0 %v1442
      %1446 = vmatprep.subr.bf16.mxu0 0
      %1447 = vmatpush1.bf16.msra.mxu0 0
      %1448 = vmatprep.subr.bf16.mxu0 0
      %1449 = vmatpush1.bf16.msra.mxu0 0
      %1450 = vmatprep.subr.bf16.mxu0 0
      %1451 = vmatpush1.bf16.msra.mxu0 0
      %1452 = vmatprep.subr.bf16.mxu0 0
      %1453 = vmatpush1.bf16.msra.mxu0 0
      %1454 = vmatprep.subr.bf16.mxu0 0
      %1455 = vmatpush1.bf16.msra.mxu0 0
      %1456 = vmatprep.subr.bf16.mxu0 0
      %1457 = vmatpush1.bf16.msra.mxu0 0
      %1458 = vmatprep.subr.bf16.mxu0 0
      %1459 = vmatpush1.bf16.msra.mxu0 0
      %1460 = vmatprep.subr.bf16.mxu0 0
      %1461 = vmatpush1.bf16.msra.mxu0 0
      %1462 = vmatprep.subr.bf16.mxu0 0
      %1463 = vmatpush1.bf16.msra.mxu0 0
      %1464 = vmatprep.subr.bf16.mxu0 0
      %1465 = vmatpush1.bf16.msra.mxu0 0
      %1466 = vmatprep.subr.bf16.mxu0 0
      %1467 = vmatpush1.bf16.msra.mxu0 0
      %1468 = vmatprep.subr.bf16.mxu0 0
      %1469 = vmatpush1.bf16.msra.mxu0 0
      %1470 = vmatprep.subr.bf16.mxu0 0
      %1471 = vmatpush1.bf16.msra.mxu0 0
      %1472 = vmatprep.subr.bf16.mxu0 0
      %1473 = vmatpush1.bf16.msra.mxu0 0
      %1474 = vmatprep.subr.bf16.mxu0 0
      %1475 = vmatpush1.bf16.msra.mxu0 0
      %1476 = vmatprep.mubr.bf16.mxu0 0
      %1477 = vmatmul.mubr.bf16.gmra.mrb[0].mxu0 %v1440
      %v1478 = vpop.f32.mrb[0].mxu0
      %v1479 = vadd.f32 0.0, %v1478
      %v1480 = vpop.f32.mrb[0].mxu0
      %v1481 = vpop.f32.mrb[0].mxu0
      %v1482 = vpop.f32.mrb[0].mxu0
      %1483 = vdwg.mxu0
      %v1485 = vsel %vm1063, %v1167, 0
      %v1487 = vsel %vm1171, %v682, 0
      %1489 = vmatprep.subr.bf16.mxu0 0
      %1490 = vmatpush1.bf16.msra.mxu0 %v1487
      %1491 = vmatprep.subr.bf16.mxu0 0
      %1492 = vmatpush1.bf16.msra.mxu0 0
      %1493 = vmatprep.subr.bf16.mxu0 0
      %1494 = vmatpush1.bf16.msra.mxu0 0
      %1495 = vmatprep.subr.bf16.mxu0 0
      %1496 = vmatpush1.bf16.msra.mxu0 0
      %1497 = vmatprep.subr.bf16.mxu0 0
      %1498 = vmatpush1.bf16.msra.mxu0 0
      %1499 = vmatprep.subr.bf16.mxu0 0
      %1500 = vmatpush1.bf16.msra.mxu0 0
      %1501 = vmatprep.subr.bf16.mxu0 0
      %1502 = vmatpush1.bf16.msra.mxu0 0
      %1503 = vmatprep.subr.bf16.mxu0 0
      %1504 = vmatpush1.bf16.msra.mxu0 0
      %1505 = vmatprep.subr.bf16.mxu0 0
      %1506 = vmatpush1.bf16.msra.mxu0 0
      %1507 = vmatprep.subr.bf16.mxu0 0
      %1508 = vmatpush1.bf16.msra.mxu0 0
      %1509 = vmatprep.subr.bf16.mxu0 0
      %1510 = vmatpush1.bf16.msra.mxu0 0
      %1511 = vmatprep.subr.bf16.mxu0 0
      %1512 = vmatpush1.bf16.msra.mxu0 0
      %1513 = vmatprep.subr.bf16.mxu0 0
      %1514 = vmatpush1.bf16.msra.mxu0 0
      %1515 = vmatprep.subr.bf16.mxu0 0
      %1516 = vmatpush1.bf16.msra.mxu0 0
      %1517 = vmatprep.subr.bf16.mxu0 0
      %1518 = vmatpush1.bf16.msra.mxu0 0
      %1519 = vmatprep.subr.bf16.mxu0 0
      %1520 = vmatpush1.bf16.msra.mxu0 0
      %1521 = vmatprep.mubr.bf16.mxu0 0
      %1522 = vmatmul.mubr.bf16.gmra.mrb[0].mxu0 %v1485
      %v1523 = vpop.f32.mrb[0].mxu0
      %v1524 = vadd.f32 0.0, %v1523
      %v1525 = vpop.f32.mrb[0].mxu0
      %v1526 = vpop.f32.mrb[0].mxu0
      %v1527 = vpop.f32.mrb[0].mxu0
      %1528 = vdwg.mxu0
      %v1529 = vpack.c.bf16 %v1254, %v1209
      %v1530 = vpack.c.bf16 %v1344, %v1299
      %v1531 = vpack.c.bf16 %v1434, %v1389
      %v1532 = vpack.c.bf16 %v1524, %v1479
      %v1534 = vlaneseq
      %v1535 = vshrl.u32 %v1534, 7
      %v1536 = vsub.s32 0, %v1535
      %v1537 = vrot.slane %v286, %v1536
      %v1543 = vunpack.c.l.b16 %v273
      %v1544 = vunpack.c.l.b16 %v274
      %v1545 = vunpack.c.l.b16 %v275
      %v1546 = vunpack.c.l.b16 %v276
      %v1547 = vpack.c.b16 %v1544, %v1543
      %v1548 = vpack.c.b16 %v1546, %v1545
      %v1552 = vsel %vm335, %v1529, 0
      %v1555 = vsel %vm335, %v1530, 0
      %v1558 = vsel %vm335, %v1531, 0
      %v1561 = vsel %vm335, %v1532, 0
      %1563 = vmatprep.subr.bf16.mxu0 0
      %1564 = vmatpush1.bf16.msra.mxu0 %v1547
      %1565 = vmatprep.subr.bf16.mxu0 0
      %1566 = vmatpush1.bf16.msra.mxu0 %v1548
      %1567 = vmatprep.subr.bf16.mxu0 0
      %1568 = vmatpush1.bf16.msra.mxu0 0
      %1569 = vmatprep.subr.bf16.mxu0 0
      %1570 = vmatpush1.bf16.msra.mxu0 0
      %1571 = vmatprep.subr.bf16.mxu0 0
      %1572 = vmatpush1.bf16.msra.mxu0 0
      %1573 = vmatprep.subr.bf16.mxu0 0
      %1574 = vmatpush1.bf16.msra.mxu0 0
      %1575 = vmatprep.subr.bf16.mxu0 0
      %1576 = vmatpush1.bf16.msra.mxu0 0
      %1577 = vmatprep.subr.bf16.mxu0 0
      %1578 = vmatpush1.bf16.msra.mxu0 0
      %1579 = vmatprep.subr.bf16.mxu0 0
      %1580 = vmatpush1.bf16.msra.mxu0 0
      %1581 = vmatprep.subr.bf16.mxu0 0
      %1582 = vmatpush1.bf16.msra.mxu0 0
      %1583 = vmatprep.subr.bf16.mxu0 0
      %1584 = vmatpush1.bf16.msra.mxu0 0
      %1585 = vmatprep.subr.bf16.mxu0 0
      %1586 = vmatpush1.bf16.msra.mxu0 0
      %1587 = vmatprep.subr.bf16.mxu0 0
      %1588 = vmatpush1.bf16.msra.mxu0 0
      %1589 = vmatprep.subr.bf16.mxu0 0
      %1590 = vmatpush1.bf16.msra.mxu0 0
      %1591 = vmatprep.subr.bf16.mxu0 0
      %1592 = vmatpush1.bf16.msra.mxu0 0
      %1593 = vmatprep.subr.bf16.mxu0 0
      %1594 = vmatpush1.bf16.msra.mxu0 0
      %1595 = vmatprep.mubr.bf16.mxu0 0
      %1596 = vmatmul.mubr.bf16.gmra.mrb[0].mxu0 %v1552
      %v1597 = vpop.f32.mrb[0].mxu0
      %v1598 = vadd.f32 %v1537, %v1597
      %v1599 = vpop.f32.mrb[0].mxu0
      %v1600 = vpop.f32.mrb[0].mxu0
      %v1601 = vadd.f32 %v1537, %v1600
      %v1602 = vpop.f32.mrb[0].mxu0
      %1603 = vmatprep.mubr.bf16.mxu0 0
      %1604 = vmatmul.mubr.bf16.gmra.mrb[0].mxu0 %v1555
      %v1605 = vpop.f32.mrb[0].mxu0
      %v1606 = vadd.f32 %v1537, %v1605
      %v1607 = vpop.f32.mrb[0].mxu0
      %v1608 = vpop.f32.mrb[0].mxu0
      %v1609 = vadd.f32 %v1537, %v1608
      %v1610 = vpop.f32.mrb[0].mxu0
      %1611 = vmatprep.mubr.bf16.mxu0 0
      %1612 = vmatmul.mubr.bf16.gmra.mrb[0].mxu0 %v1558
      %v1613 = vpop.f32.mrb[0].mxu0
      %v1614 = vadd.f32 %v1537, %v1613
      %v1615 = vpop.f32.mrb[0].mxu0
      %v1616 = vpop.f32.mrb[0].mxu0
      %v1617 = vadd.f32 %v1537, %v1616
      %v1618 = vpop.f32.mrb[0].mxu0
      %1619 = vmatprep.mubr.bf16.mxu0 0
      %1620 = vmatmul.mubr.bf16.gmra.mrb[0].mxu0 %v1561
      %v1621 = vpop.f32.mrb[0].mxu0
      %v1622 = vadd.f32 %v1537, %v1621
      %v1623 = vpop.f32.mrb[0].mxu0
      %v1624 = vpop.f32.mrb[0].mxu0
      %v1625 = vadd.f32 %v1537, %v1624
      %v1626 = vpop.f32.mrb[0].mxu0
      %1627 = vdwg.mxu0
      %1628 = vst.msk [vmem:[%s261 + $0x40] sm:$0xff] %vm335, %v1598
      %1629 = vst.msk [vmem:[%s261 + $0x48] sm:$0xff] %vm335, %v1601
      %1630 = vst.msk [vmem:[%s261 + $0x50] sm:$0xff] %vm335, %v1606
      %1631 = vst.msk [vmem:[%s261 + $0x58] sm:$0xff] %vm335, %v1609
      %1632 = vst.msk [vmem:[%s261 + $0x60] sm:$0xff] %vm335, %v1614
      %1633 = vst.msk [vmem:[%s261 + $0x68] sm:$0xff] %vm335, %v1617
      %1634 = vst.msk [vmem:[%s261 + $0x70] sm:$0xff] %vm335, %v1622
      %1635 = vst.msk [vmem:[%s261 + $0x78] sm:$0xff] %vm335, %v1625
      %p1636 = scmp.lt.s32.totalorder %s16, 1
      %s1637 = scalar_select %p1636, %s16, 1
      %s1638 = smul.addr %s1637, 16
      %s1639 = smul.addr %s1638, 8
      %s1640 = scalar_lea.vmem %s5, %s1639
      // Predicated region
      $region41: #{tpu_custom_call.1} parent=39 // pred_check
        %p1641 = pneg %p154
      $region42: #{tpu_custom_call.1} parent=39 // pred_check_branch
        %1643 = sbr.rel (%p1641) target = $region44
      $region43: #{tpu_custom_call.1} parent=39 // pred_region
        _
      $region44: #{tpu_custom_call.1} parent=39 // pred_fallthru
        _
    $region40: #{tpu_custom_call.1} parent=5 // pred_fallthru
      _
    %p1644 = scmp.le.s32.totalorder 2, %s11
    // Predicated region
    $region45: #{tpu_custom_call.1} parent=5 // pred_check
      %p1645 = pneg %p1644
    $region46: #{tpu_custom_call.1} parent=5 // pred_check_branch
      %1647 = sbr.rel (%p1645) target = $region48
    $region47: #{tpu_custom_call.1} parent=5 // pred_region
      %s1648 = ssub.s32 %s11, 2
      // Predicated region
      $region49: #{tpu_custom_call.1} parent=47 // pred_check
        %p1649 = pneg %p160
      $region50: #{tpu_custom_call.1} parent=47 // pred_check_branch
        %1651 = sbr.rel (%p1649) target = $region52
      $region51: #{tpu_custom_call.1} parent=47 // pred_region
        %p1652 = scmp.lt.s32.totalorder %s17, 1
        %s1653 = scalar_select %p1652, %s17, 1
        %s1654 = smul.addr %s1653, 16
        %s1655 = smul.addr %s1654, 8
        %s1656 = scalar_lea.vmem %s5, %s1655
      $region52: #{tpu_custom_call.1} parent=47 // pred_fallthru
        _
    $region48: #{tpu_custom_call.1} parent=5 // pred_fallthru
      _
  $region6: #{tpu_custom_call.1} parent=0 // loop_footer
    %s15 = sadd.s32 1, %s11
  $region7: #{tpu_custom_call.1} parent=0 // loop_footer_branch
    %10 = sbr.rel target = $region3
  $region8: #{tpu_custom_call.1} parent=0 // loop_exit
    _

</llo_original>
